<compile_context>
chip_gen: v7x
topology: tpu7x:2x2x1
jax: 0.10.0
libtpu: 0.0.40
codegen_flags: <defaults>
</compile_context>

<pallas_src>
from functools import partial

import jax
import jax.numpy as jnp
from jax.experimental import pallas as pl
from jax.experimental.pallas import tpu as pltpu

# ---- cfg constants -----------------------------------------------------------
MAX_NUM_OBJ = 4            # cfg.DATA.MAX_NUM_OBJ
MESSAGE_PASSING_STEPS = 2  # cfg.GCNN.MESSAGE_PASSING_STEPS
FEAT_CHANNELS = 7          # encoder feature channels
C = FEAT_CHANNELS + 1      # self.input_channels = input_channels + 1 (mask channel)
H = W = 16                 # feats spatial == objs_masks spatial == cfg.DATA.IMAGE_SIZE
B = 2


# ---- Pallas kernel -----------------------------------------------------------
def _gcnn_kernel(msg_steps, n_batch, n_nodes, cc, hw,
                 slab_ref,    # VMEM (Cc, B*N*HW)  initial node states (batch,node)-major on lanes
                 lmask_ref,   # VMEM (1,  B*N*HW)  validity lane mask (1.0 / 0.0)
                 packed_ref,  # VMEM (3Cc, 128)    [W_msg; W_upd; W_ro] cols 0..Cc-1, biases col Cc
                 out_ref):    # VMEM (1,  B*N*HW)
    total_lanes = n_batch * n_nodes * hw

    # packed params: one DMA'd block, static sub-slices at the ref level
    w_all = packed_ref[:, 0:cc]                        # (3Cc, Cc)  rows [0,Cc)=W_msg, [Cc,2Cc)=W_upd, 2Cc=W_ro
    bupd = packed_ref[0:cc, cc:cc + 1]                 # (Cc, 1)
    bro = packed_ref[2 * cc:2 * cc + 1, cc:cc + 1]     # (1, 1)

    lmask = lmask_ref[...]                             # (1, BNHW)
    # loop-invariant broadcasts hoisted out of the message-passing loop
    lmask_b = jnp.broadcast_to(lmask, (cc, total_lanes))
    bupd_b = jnp.broadcast_to(bupd, (cc, total_lanes))

    states = slab_ref[...]                             # (Cc, BNHW)

    logits = None
    # msg_steps update passes + 1 read-out pass, all driven by the SAME fused matmul.
    for step in range(msg_steps + 1):
        fused = jnp.dot(w_all, states, preferred_element_type=jnp.float32)  # (3Cc, BNHW)
        if step == msg_steps:
            # read-out row of the fused matmul on the final (post-update) states
            logits = fused[2 * cc:2 * cc + 1, :] + bro
            break
        msgs = fused[0:cc, :] * lmask_b                # messages from invalid nodes are zeroed
        upd = fused[cc:2 * cc, :]
        # per-batch sum over nodes: static, 128-aligned lane slices; re-broadcast per node
        pieces = []
        for b in range(n_batch):
            base = b * n_nodes * hw
            tot = msgs[:, base:base + hw]
            for n in range(1, n_nodes):
                tot = tot + msgs[:, base + n * hw:base + (n + 1) * hw]
            pieces.extend([tot] * n_nodes)
        total_t = jnp.concatenate(pieces, axis=1)      # (Cc, BNHW)
        # neighbor sum excludes self: total - own (masked) message
        states = jnp.maximum(upd + bupd_b + (total_t - msgs), 0.0)

    # single lane-dense 2048-wide store; invalid nodes forced to exactly 0
    out_ref[...] = jax.nn.sigmoid(logits) * lmask


# ---- wrapper -----------------------------------------------------------------
def gcnn_forward(feats, objs_masks, valid_indices, params,
                 msg_steps=MESSAGE_PASSING_STEPS):
    Bv, Cf, Hf, Wf = feats.shape
    _, N, Hm, Wm = objs_masks.shape
    Cc = Cf + 1
    HW = Hf * Wf
    total = Bv * N * HW
    assert HW % 128 == 0, "spatial lanes per node must be 128-aligned"

    # F.interpolate(objs_masks, size=feats.shape[-2:]) -- default 'nearest'
    # TODO(synk): jax.image.resize('nearest') may not bit-match torch F.interpolate pixel picks.
    if (Hm, Wm) != (Hf, Wf):
        masks_r = jax.image.resize(objs_masks, (Bv, N, Hf, Wf), method="nearest")
    else:
        masks_r = objs_masks
    masks_r = masks_r.astype(jnp.float32)

    # Initial node-state slab (Cc, B*N*HW): rows 0..Cf-1 are that batch element's
    # image feats (replicated per node -- ~64 KiB HBM, essentially free), row Cf is
    # the node's own mask.  Built host-side so the kernel does zero assembly work.
    feats_b = jnp.broadcast_to(
        feats.astype(jnp.float32).reshape(Bv, 1, Cf, HW), (Bv, N, Cf, HW))
    slab = jnp.concatenate([feats_b, masks_r.reshape(Bv, N, 1, HW)], axis=2)  # (B,N,Cc,HW)
    slab = jnp.transpose(slab, (2, 0, 1, 3)).reshape(Cc, total)

    # validity as a (1, B*N*HW) lane mask (batch-major, node-major, HW lanes per node)
    lane_mask = jnp.repeat(valid_indices.astype(jnp.float32), HW, axis=1).reshape(1, total)

    # all parameters packed into ONE (3Cc, 128) block:
    #   cols 0..Cc-1 : [W_msg; W_upd; W_ro] stacked on sublanes (read-out folded in)
    #   col  Cc      : b_upd in rows 0..Cc-1, b_ro in row 2Cc
    packed = jnp.zeros((3 * Cc, 128), jnp.float32)
    packed = packed.at[0:Cc, 0:Cc].set(params["w_msg"])
    packed = packed.at[Cc:2 * Cc, 0:Cc].set(params["w_upd"])
    packed = packed.at[2 * Cc:2 * Cc + 1, 0:Cc].set(params["w_ro"])
    packed = packed.at[0:Cc, Cc:Cc + 1].set(params["b_upd"])
    packed = packed.at[2 * Cc:2 * Cc + 1, Cc:Cc + 1].set(params["b_ro"])

    kernel = partial(_gcnn_kernel, msg_steps, Bv, N, Cc, HW)

    # Single invocation covering the whole batch (no per-batch grid steps / DMAs).
    out = pl.pallas_call(
        kernel,
        out_shape=jax.ShapeDtypeStruct((1, total), jnp.float32),
        grid_spec=pl.GridSpec(
            grid=(1,),
            in_specs=[
                pl.BlockSpec((Cc, total), lambda i: (0, 0)),       # state slab
                pl.BlockSpec((1, total), lambda i: (0, 0)),        # validity lane mask
                pl.BlockSpec((3 * Cc, 128), lambda i: (0, 0)),     # packed params
            ],
            out_specs=pl.BlockSpec((1, total), lambda i: (0, 0)),
        ),
        compiler_params=pltpu.CompilerParams(dimension_semantics=("arbitrary",)),
    )(slab, lane_mask, packed)

    out_masks = out.reshape(Bv, N, Hf, Wf)
    if (Hm, Wm) != (Hf, Wf):
        out_masks = jax.image.resize(out_masks, (Bv, N, Hm, Wm), method="nearest")
    # TODO(synk): .astype would truncate sigmoid outputs if upstream passed integer masks.
    return out_masks.astype(objs_masks.dtype)


# ---- pure-JAX reference (same math, vectorized) for correctness check --------
def gcnn_reference(feats, objs_masks, valid_indices, params, msg_steps):
    Bv, Cf, Hf, Wf = feats.shape
    _, N, Hm, Wm = objs_masks.shape
    masks_r = objs_masks if (Hm, Wm) == (Hf, Wf) else \
        jax.image.resize(objs_masks, (Bv, N, Hf, Wf), method="nearest")
    feats_b = jnp.broadcast_to(feats[:, None], (Bv, N, Cf, Hf, Wf))
    s = jnp.concatenate([feats_b, masks_r[:, :, None]], axis=2)
    s = s.reshape(Bv, N, Cf + 1, Hf * Wf).astype(jnp.float32)
    v = valid_indices.astype(jnp.float32)[:, :, None, None]
    for _ in range(msg_steps):
        msgs = jnp.einsum("dc,bncp->bndp", params["w_msg"], s)
        total = (msgs * v).sum(axis=1, keepdims=True)
        upd = jnp.einsum("dc,bncp->bndp", params["w_upd"], s) + params["b_upd"][None, None]
        s = jnp.maximum(upd + total - msgs * v, 0.0)
    logits = jnp.einsum("oc,bncp->bnop", params["w_ro"], s) + params["b_ro"][None, None]
    out = jax.nn.sigmoid(logits) * v
    return out.reshape(Bv, N, Hf, Wf).astype(objs_masks.dtype)


if __name__ == "__main__":
    key = jax.random.PRNGKey(0)
    kf, km, k1, k2, k3, k4, k5 = jax.random.split(key, 7)

    feats = jax.random.normal(kf, (B, FEAT_CHANNELS, H, W), jnp.float32)
    objs_masks = (jax.random.uniform(km, (B, MAX_NUM_OBJ, H, W)) > 0.5).astype(jnp.float32)
    valid_indices = jnp.array([[True, True, True, False],
                               [True, False, True, True]])

    params = {
        "w_msg": 0.1 * jax.random.normal(k1, (C, C), jnp.float32),
        "w_upd": 0.1 * jax.random.normal(k2, (C, C), jnp.float32),
        "b_upd": 0.1 * jax.random.normal(k3, (C, 1), jnp.float32),
        "w_ro": 0.1 * jax.random.normal(k4, (1, C), jnp.float32),
        "b_ro": 0.1 * jax.random.normal(k5, (1, 1), jnp.float32),
    }

    out = gcnn_forward(feats, objs_masks, valid_indices, params)
    out = jax.block_until_ready(out)

    ref = gcnn_reference(feats, objs_masks, valid_indices, params, MESSAGE_PASSING_STEPS)
    assert out.shape == objs_masks.shape
    assert bool(jnp.allclose(out, ref, atol=1e-5, rtol=1e-5))
    # invalid nodes must stay exactly zero (out_masks = zeros_like(objs_masks))
    assert float(jnp.abs(out[0, 3]).max()) == 0.0
    assert float(jnp.abs(out[1, 1]).max()) == 0.0

    print("KERNEL_OK")
</pallas_src>

<mosaic_0001>
module attributes {stable_mosaic.version = 11 : i64} {
  func.func @_gcnn_kernel(%arg0: i32, %arg1: memref<8x2048xf32, #tpu.memory_space<vmem>>, %arg2: memref<1x2048xf32, #tpu.memory_space<vmem>>, %arg3: memref<24x128xf32, #tpu.memory_space<vmem>>, %arg4: memref<1x2048xf32, #tpu.memory_space<vmem>>) attributes {dimension_semantics = [#tpu.dimension_semantics<arbitrary>], iteration_bounds = array<i64: 1>, scalar_prefetch = 0 : i64, scratch_operands = 0 : i64, tpu.core_type = #tpu.core_type<tc>, window_params = [{pipeline_mode = #tpu.pipeline_mode<synchronous>, transform_indices = @transform_0, window_bounds = array<i64: 8, 2048>}, {pipeline_mode = #tpu.pipeline_mode<synchronous>, transform_indices = @transform_1, window_bounds = array<i64: 1, 2048>}, {pipeline_mode = #tpu.pipeline_mode<synchronous>, transform_indices = @transform_2, window_bounds = array<i64: 24, 128>}, {pipeline_mode = #tpu.pipeline_mode<synchronous>, transform_indices = @transform_3, window_bounds = array<i64: 1, 2048>}]} {
    %c0 = arith.constant 0 : index
    %c0_0 = arith.constant 0 : index
    %0 = vector.load %arg3[%c0, %c0_0] : memref<24x128xf32, #tpu.memory_space<vmem>>, vector<24x8xf32>
    %c0_1 = arith.constant 0 : index
    %c8 = arith.constant 8 : index
    %1 = vector.load %arg3[%c0_1, %c8] : memref<24x128xf32, #tpu.memory_space<vmem>>, vector<8x1xf32>
    %c16 = arith.constant 16 : index
    %c8_2 = arith.constant 8 : index
    %2 = vector.load %arg3[%c16, %c8_2] : memref<24x128xf32, #tpu.memory_space<vmem>>, vector<1x1xf32>
    %c0_3 = arith.constant 0 : index
    %c0_4 = arith.constant 0 : index
    %3 = vector.load %arg2[%c0_3, %c0_4] : memref<1x2048xf32, #tpu.memory_space<vmem>>, vector<1x2048xf32>
    %4 = vector.shape_cast %3 : vector<1x2048xf32> to vector<1x2048xf32>
    %5 = vector.broadcast %4 : vector<1x2048xf32> to vector<8x2048xf32>
    %6 = vector.shape_cast %1 : vector<8x1xf32> to vector<8x1xf32>
    %7 = vector.broadcast %6 : vector<8x1xf32> to vector<8x2048xf32>
    %c0_5 = arith.constant 0 : index
    %c0_6 = arith.constant 0 : index
    %8 = vector.load %arg1[%c0_5, %c0_6] : memref<8x2048xf32, #tpu.memory_space<vmem>>, vector<8x2048xf32>
    %cst = arith.constant dense<0.000000e+00> : vector<24x2048xf32>
    %9 = tpu.matmul %0, %8, %cst {dimension_numbers = #tpu.dot_dimension_numbers<[1], [0], [0], [1], [0, 0, 1, 1], [], []>} : vector<24x8xf32>, vector<8x2048xf32>, vector<24x2048xf32> -> vector<24x2048xf32>
    %10 = vector.extract_strided_slice %9 {offsets = [0, 0], sizes = [8, 2048], strides = [1, 1]} : vector<24x2048xf32> to vector<8x2048xf32>
    %11 = arith.mulf %10, %5 : vector<8x2048xf32>
    %12 = vector.extract_strided_slice %9 {offsets = [8, 0], sizes = [8, 2048], strides = [1, 1]} : vector<24x2048xf32> to vector<8x2048xf32>
    %13 = vector.extract_strided_slice %11 {offsets = [0, 0], sizes = [8, 256], strides = [1, 1]} : vector<8x2048xf32> to vector<8x256xf32>
    %14 = vector.extract_strided_slice %11 {offsets = [0, 256], sizes = [8, 256], strides = [1, 1]} : vector<8x2048xf32> to vector<8x256xf32>
    %15 = arith.addf %13, %14 : vector<8x256xf32>
    %16 = vector.extract_strided_slice %11 {offsets = [0, 512], sizes = [8, 256], strides = [1, 1]} : vector<8x2048xf32> to vector<8x256xf32>
    %17 = arith.addf %15, %16 : vector<8x256xf32>
    %18 = vector.extract_strided_slice %11 {offsets = [0, 768], sizes = [8, 256], strides = [1, 1]} : vector<8x2048xf32> to vector<8x256xf32>
    %19 = arith.addf %17, %18 : vector<8x256xf32>
    %20 = vector.extract_strided_slice %11 {offsets = [0, 1024], sizes = [8, 256], strides = [1, 1]} : vector<8x2048xf32> to vector<8x256xf32>
    %21 = vector.extract_strided_slice %11 {offsets = [0, 1280], sizes = [8, 256], strides = [1, 1]} : vector<8x2048xf32> to vector<8x256xf32>
    %22 = arith.addf %20, %21 : vector<8x256xf32>
    %23 = vector.extract_strided_slice %11 {offsets = [0, 1536], sizes = [8, 256], strides = [1, 1]} : vector<8x2048xf32> to vector<8x256xf32>
    %24 = arith.addf %22, %23 : vector<8x256xf32>
    %25 = vector.extract_strided_slice %11 {offsets = [0, 1792], sizes = [8, 256], strides = [1, 1]} : vector<8x2048xf32> to vector<8x256xf32>
    %26 = arith.addf %24, %25 : vector<8x256xf32>
    %27 = tpu.concatenate %19, %19, %19, %19, %26, %26, %26, %26 in 1 : vector<8x256xf32>, vector<8x256xf32>, vector<8x256xf32>, vector<8x256xf32>, vector<8x256xf32>, vector<8x256xf32>, vector<8x256xf32>, vector<8x256xf32> -> vector<8x2048xf32>
    %28 = arith.addf %12, %7 : vector<8x2048xf32>
    %29 = arith.subf %27, %11 : vector<8x2048xf32>
    %30 = arith.addf %28, %29 : vector<8x2048xf32>
    %cst_7 = arith.constant 0.000000e+00 : f32
    %31 = vector.broadcast %cst_7 : f32 to vector<8x2048xf32>
    %32 = arith.maximumf %30, %31 : vector<8x2048xf32>
    %cst_8 = arith.constant dense<0.000000e+00> : vector<24x2048xf32>
    %33 = tpu.matmul %0, %32, %cst_8 {dimension_numbers = #tpu.dot_dimension_numbers<[1], [0], [0], [1], [0, 0, 1, 1], [], []>} : vector<24x8xf32>, vector<8x2048xf32>, vector<24x2048xf32> -> vector<24x2048xf32>
    %34 = vector.extract_strided_slice %33 {offsets = [0, 0], sizes = [8, 2048], strides = [1, 1]} : vector<24x2048xf32> to vector<8x2048xf32>
    %35 = arith.mulf %34, %5 : vector<8x2048xf32>
    %36 = vector.extract_strided_slice %33 {offsets = [8, 0], sizes = [8, 2048], strides = [1, 1]} : vector<24x2048xf32> to vector<8x2048xf32>
    %37 = vector.extract_strided_slice %35 {offsets = [0, 0], sizes = [8, 256], strides = [1, 1]} : vector<8x2048xf32> to vector<8x256xf32>
    %38 = vector.extract_strided_slice %35 {offsets = [0, 256], sizes = [8, 256], strides = [1, 1]} : vector<8x2048xf32> to vector<8x256xf32>
    %39 = arith.addf %37, %38 : vector<8x256xf32>
    %40 = vector.extract_strided_slice %35 {offsets = [0, 512], sizes = [8, 256], strides = [1, 1]} : vector<8x2048xf32> to vector<8x256xf32>
    %41 = arith.addf %39, %40 : vector<8x256xf32>
    %42 = vector.extract_strided_slice %35 {offsets = [0, 768], sizes = [8, 256], strides = [1, 1]} : vector<8x2048xf32> to vector<8x256xf32>
    %43 = arith.addf %41, %42 : vector<8x256xf32>
    %44 = vector.extract_strided_slice %35 {offsets = [0, 1024], sizes = [8, 256], strides = [1, 1]} : vector<8x2048xf32> to vector<8x256xf32>
    %45 = vector.extract_strided_slice %35 {offsets = [0, 1280], sizes = [8, 256], strides = [1, 1]} : vector<8x2048xf32> to vector<8x256xf32>
    %46 = arith.addf %44, %45 : vector<8x256xf32>
    %47 = vector.extract_strided_slice %35 {offsets = [0, 1536], sizes = [8, 256], strides = [1, 1]} : vector<8x2048xf32> to vector<8x256xf32>
    %48 = arith.addf %46, %47 : vector<8x256xf32>
    %49 = vector.extract_strided_slice %35 {offsets = [0, 1792], sizes = [8, 256], strides = [1, 1]} : vector<8x2048xf32> to vector<8x256xf32>
    %50 = arith.addf %48, %49 : vector<8x256xf32>
    %51 = tpu.concatenate %43, %43, %43, %43, %50, %50, %50, %50 in 1 : vector<8x256xf32>, vector<8x256xf32>, vector<8x256xf32>, vector<8x256xf32>, vector<8x256xf32>, vector<8x256xf32>, vector<8x256xf32>, vector<8x256xf32> -> vector<8x2048xf32>
    %52 = arith.addf %36, %7 : vector<8x2048xf32>
    %53 = arith.subf %51, %35 : vector<8x2048xf32>
    %54 = arith.addf %52, %53 : vector<8x2048xf32>
    %cst_9 = arith.constant 0.000000e+00 : f32
    %55 = vector.broadcast %cst_9 : f32 to vector<8x2048xf32>
    %56 = arith.maximumf %54, %55 : vector<8x2048xf32>
    %cst_10 = arith.constant dense<0.000000e+00> : vector<24x2048xf32>
    %57 = tpu.matmul %0, %56, %cst_10 {dimension_numbers = #tpu.dot_dimension_numbers<[1], [0], [0], [1], [0, 0, 1, 1], [], []>} : vector<24x8xf32>, vector<8x2048xf32>, vector<24x2048xf32> -> vector<24x2048xf32>
    %58 = vector.extract_strided_slice %57 {offsets = [16, 0], sizes = [1, 2048], strides = [1, 1]} : vector<24x2048xf32> to vector<1x2048xf32>
    %59 = vector.broadcast %2 : vector<1x1xf32> to vector<1x2048xf32>
    %60 = arith.addf %58, %59 : vector<1x2048xf32>
    %61 = arith.negf %60 : vector<1x2048xf32>
    %62 = math.exp %61 : vector<1x2048xf32>
    %cst_11 = arith.constant 1.000000e+00 : f32
    %63 = vector.broadcast %cst_11 : f32 to vector<1x2048xf32>
    %64 = arith.addf %63, %62 : vector<1x2048xf32>
    %65 = arith.divf %63, %64 : vector<1x2048xf32>
    %66 = arith.mulf %65, %3 : vector<1x2048xf32>
    %c0_12 = arith.constant 0 : index
    %c0_13 = arith.constant 0 : index
    %67 = vector.load %arg4[%c0_12, %c0_13] : memref<1x2048xf32, #tpu.memory_space<vmem>>, vector<1x2048xf32>
    tpu.vector_store %arg4[%c0_12, %c0_13], %66 {strides = array<i32>} : memref<1x2048xf32, #tpu.memory_space<vmem>>, vector<1x2048xf32>,
    return
  }
  func.func @transform_0(%arg0: i32) -> (i32, i32) {
    %c0_i32 = arith.constant 0 : i32
    %c0_i32_0 = arith.constant 0 : i32
    %c0_i32_1 = arith.constant 0 : i32
    return %c0_i32, %c0_i32_0 : i32, i32
  }
  func.func @transform_1(%arg0: i32) -> (i32, i32) {
    %c0_i32 = arith.constant 0 : i32
    %c0_i32_0 = arith.constant 0 : i32
    %c0_i32_1 = arith.constant 0 : i32
    return %c0_i32, %c0_i32_0 : i32, i32
  }
  func.func @transform_2(%arg0: i32) -> (i32, i32) {
    %c0_i32 = arith.constant 0 : i32
    %c0_i32_0 = arith.constant 0 : i32
    %c0_i32_1 = arith.constant 0 : i32
    return %c0_i32, %c0_i32_0 : i32, i32
  }
  func.func @transform_3(%arg0: i32) -> (i32, i32) {
    %c0_i32 = arith.constant 0 : i32
    %c0_i32_0 = arith.constant 0 : i32
    %c0_i32_1 = arith.constant 0 : i32
    return %c0_i32, %c0_i32_0 : i32, i32
  }
}

</mosaic_0001>

<llo_original>
// kernel: tpu_custom_call.1
$region0: #{tpu_custom_call.1}
  #allocation0 [shape = 'u32[]', space=smem, size = 0x4, offset = 0x4, fixed_abs, tag = 'smem constant byte address 0x4 - core index']
  #allocation1 [shape = 'u32[144,128]{1,0:T(1,128)}', space=vmem, size = 0x12000, scoped, tag = 'internal scratch']
  %s0 = inlined_call_operand.hbm [shape: f32[8,2048], index: 0, kind: input, shape index: {}]
  %s1 = inlined_call_operand.hbm [shape: f32[1,2048], index: 1, kind: input, shape index: {}]
  %s2 = inlined_call_operand.hbm [shape: f32[24,128], index: 2, kind: input, shape index: {}]
  %s3 = inlined_call_operand.hbm [shape: f32[1,2048], index: 3, kind: output, shape index: {}]
  %s4 = sld [smem:[#allocation0]]
  $region34: #{tpu_custom_call.1} parent=0
    _
  %s6 = ssub.s32 1, %s4
  %s7 = scalar_select 0, %s6, %s4
  $region1: #{tpu_custom_call.1} parent=0
    #allocation2 [shape = 'u8[65536]{0}', space=vmem, size = 0x10000, scoped, tag = 'input window, operand 0, single buffered']
    #allocation3 [shape = 's32[1]{0}', space=sflag, size = 0x4, scoped, tag = 'scoped memory for tpu_custom_call.1']
    #allocation4 [shape = 's32[1]{0}', space=sflag, size = 0x4, scoped, tag = 'scoped memory for tpu_custom_call.1']
    #allocation5 [shape = 'u8[8192]{0}', space=vmem, size = 0x2000, scoped, tag = 'input window, operand 1, single buffered']
    #allocation6 [shape = 's32[1]{0}', space=sflag, size = 0x4, scoped, tag = 'scoped memory for tpu_custom_call.1']
    #allocation7 [shape = 'u8[12288]{0}', space=vmem, size = 0x3000, scoped, tag = 'input window, operand 2, single buffered']
    #allocation8 [shape = 'u8[8192]{0}', space=vmem, size = 0x2000, scoped, tag = 'output window, operand 0, single buffered']
    %8 = vsyncpa [#allocation3], 0
    %9 = vsyncpa [#allocation6], 0
    %10 = vsyncpa [#allocation4], 0
    // Predicated region
    $region2: #{tpu_custom_call.1} parent=1 // pred_check
      _
    $region3: #{tpu_custom_call.1} parent=1 // pred_check_branch
      %12 = sbr.rel (0) target = $region5
    $region4: #{tpu_custom_call.1} parent=1 // pred_region
      %s14 = ssub.s32 2048, 2048
      %15 = vsyncadd [#allocation3], %s14
      %s17 = sshll.u32 [#allocation2], 4
      %s18 = int_to_ptr.vmem [resolvable:$true] %s17
      %20 = dma.hbm_to_vmem [thread:$0]  %s0, 2048, %s18, [#allocation3]
    $region5: #{tpu_custom_call.1} parent=1 // pred_fallthru
      _
    // Predicated region
    $region6: #{tpu_custom_call.1} parent=1 // pred_check
      _
    $region7: #{tpu_custom_call.1} parent=1 // pred_check_branch
      %22 = sbr.rel (0) target = $region9
    $region8: #{tpu_custom_call.1} parent=1 // pred_region
      %s24 = ssub.s32 256, 256
      %25 = vsyncadd [#allocation6], %s24
      %s27 = sshll.u32 [#allocation5], 4
      %s28 = int_to_ptr.vmem [resolvable:$true] %s27
      %30 = dma.hbm_to_vmem [thread:$0]  %s1, 256, %s28, [#allocation6]
    $region9: #{tpu_custom_call.1} parent=1 // pred_fallthru
      _
    // Predicated region
    $region10: #{tpu_custom_call.1} parent=1 // pred_check
      _
    $region11: #{tpu_custom_call.1} parent=1 // pred_check_branch
      %32 = sbr.rel (0) target = $region13
    $region12: #{tpu_custom_call.1} parent=1 // pred_region
      %s34 = ssub.s32 384, 384
      %35 = vsyncadd [#allocation6], %s34
      %s36 = sshll.u32 [#allocation7], 4
      %s37 = int_to_ptr.vmem [resolvable:$true] %s36
      %42 = dma.hbm_to_vmem [thread:$0]  %s2, 384, %s37, [#allocation6], 128, 128, 8
    $region13: #{tpu_custom_call.1} parent=1 // pred_fallthru
      _
    // Predicated region
    $region14: #{tpu_custom_call.1} parent=1 // pred_check
      _
    $region15: #{tpu_custom_call.1} parent=1 // pred_check_branch
      %44 = sbr.rel (0) target = $region17
    $region16: #{tpu_custom_call.1} parent=1 // pred_region
      %45 = dma.done [#allocation3], 2048
    $region17: #{tpu_custom_call.1} parent=1 // pred_fallthru
      _
    // Predicated region
    $region18: #{tpu_custom_call.1} parent=1 // pred_check
      _
    $region19: #{tpu_custom_call.1} parent=1 // pred_check_branch
      %47 = sbr.rel (0) target = $region21
    $region20: #{tpu_custom_call.1} parent=1 // pred_region
      %48 = dma.done [#allocation6], 256
    $region21: #{tpu_custom_call.1} parent=1 // pred_fallthru
      _
    // Predicated region
    $region22: #{tpu_custom_call.1} parent=1 // pred_check
      _
    $region23: #{tpu_custom_call.1} parent=1 // pred_check_branch
      %50 = sbr.rel (0) target = $region25
    $region24: #{tpu_custom_call.1} parent=1 // pred_region
      %51 = dma.done [#allocation6], 384
    $region25: #{tpu_custom_call.1} parent=1 // pred_fallthru
      _
    %v52 = vld [vmem:[#allocation7] sm:$0xff]
    %v53 = vld [vmem:[#allocation7 + $0x8] sm:$0xff]
    %v54 = vld [vmem:[#allocation7 + $0x10] sm:$0xff]
    %v55 = vld [vmem:[#allocation7] sm:$0xff]
    %v56 = vld [vmem:[#allocation7 + $0x10] sm:$0x1]
    %v57 = vld [vmem:[#allocation5] sm:$0xff]
    %v58 = vld [vmem:[#allocation5 + $0x8] sm:$0xff]
    %v61 = vlaneseq
    %v62 = vshrl.u32 %v61, 7
    %v63 = vsub.s32 0, %v62
    %v64 = vrot.slane %v57, %v63
    %v65 = vlaneseq
    %v66 = vshrl.u32 %v65, 7
    %v67 = vsub.s32 1, %v66
    %v68 = vrot.slane %v57, %v67
    %v69 = vlaneseq
    %v70 = vshrl.u32 %v69, 7
    %v71 = vsub.s32 2, %v70
    %v72 = vrot.slane %v57, %v71
    %v73 = vlaneseq
    %v74 = vshrl.u32 %v73, 7
    %v75 = vsub.s32 3, %v74
    %v76 = vrot.slane %v57, %v75
    %v77 = vlaneseq
    %v78 = vshrl.u32 %v77, 7
    %v79 = vsub.s32 4, %v78
    %v80 = vrot.slane %v57, %v79
    %v81 = vlaneseq
    %v82 = vshrl.u32 %v81, 7
    %v83 = vsub.s32 5, %v82
    %v84 = vrot.slane %v57, %v83
    %v85 = vlaneseq
    %v86 = vshrl.u32 %v85, 7
    %v87 = vsub.s32 6, %v86
    %v88 = vrot.slane %v57, %v87
    %v89 = vlaneseq
    %v90 = vshrl.u32 %v89, 7
    %v91 = vsub.s32 7, %v90
    %v92 = vrot.slane %v57, %v91
    %v93 = vlaneseq
    %v94 = vshrl.u32 %v93, 7
    %v95 = vsub.s32 0, %v94
    %v96 = vrot.slane %v58, %v95
    %v97 = vlaneseq
    %v98 = vshrl.u32 %v97, 7
    %v99 = vsub.s32 1, %v98
    %v100 = vrot.slane %v58, %v99
    %v101 = vlaneseq
    %v102 = vshrl.u32 %v101, 7
    %v103 = vsub.s32 2, %v102
    %v104 = vrot.slane %v58, %v103
    %v105 = vlaneseq
    %v106 = vshrl.u32 %v105, 7
    %v107 = vsub.s32 3, %v106
    %v108 = vrot.slane %v58, %v107
    %v109 = vlaneseq
    %v110 = vshrl.u32 %v109, 7
    %v111 = vsub.s32 4, %v110
    %v112 = vrot.slane %v58, %v111
    %v113 = vlaneseq
    %v114 = vshrl.u32 %v113, 7
    %v115 = vsub.s32 5, %v114
    %v116 = vrot.slane %v58, %v115
    %v117 = vlaneseq
    %v118 = vshrl.u32 %v117, 7
    %v119 = vsub.s32 6, %v118
    %v120 = vrot.slane %v58, %v119
    %v121 = vlaneseq
    %v122 = vshrl.u32 %v121, 7
    %v123 = vsub.s32 7, %v122
    %v124 = vrot.slane %v58, %v123
    %142 = vset.pattern.permute.xlu0 8
    %143 = vperm.xlu0 %142, %v55
    %v144 = vpop.permute.xlu0 %143
    %v146 = vld [vmem:[#allocation2] sm:$0xff]
    %v147 = vld [vmem:[#allocation2 + $0x8] sm:$0xff]
    %v148 = vld [vmem:[#allocation2 + $0x10] sm:$0xff]
    %v149 = vld [vmem:[#allocation2 + $0x18] sm:$0xff]
    %v150 = vld [vmem:[#allocation2 + $0x20] sm:$0xff]
    %v151 = vld [vmem:[#allocation2 + $0x28] sm:$0xff]
    %v152 = vld [vmem:[#allocation2 + $0x30] sm:$0xff]
    %v153 = vld [vmem:[#allocation2 + $0x38] sm:$0xff]
    %v154 = vld [vmem:[#allocation2 + $0x40] sm:$0xff]
    %v155 = vld [vmem:[#allocation2 + $0x48] sm:$0xff]
    %v156 = vld [vmem:[#allocation2 + $0x50] sm:$0xff]
    %v157 = vld [vmem:[#allocation2 + $0x58] sm:$0xff]
    %v158 = vld [vmem:[#allocation2 + $0x60] sm:$0xff]
    %v159 = vld [vmem:[#allocation2 + $0x68] sm:$0xff]
    %v160 = vld [vmem:[#allocation2 + $0x70] sm:$0xff]
    %v161 = vld [vmem:[#allocation2 + $0x78] sm:$0xff]
    %vm162 = vcmask 64512
    %v164 = vsel %vm162, %v52, 0
    %v167 = vsel %vm162, %v53, 0
    %v170 = vsel %vm162, %v54, 0
    %172 = vmatprep.subr.mxu0 %v147
    %173 = vmatpush1.msra.mxu0 %v146
    %174 = vmatprep.subr.mxu0 0.0
    %175 = vmatpush1.msra.mxu0 0.0
    %176 = vmatprep.subr.mxu0 0.0
    %177 = vmatpush1.msra.mxu0 0.0
    %178 = vmatprep.subr.mxu0 0.0
    %179 = vmatpush1.msra.mxu0 0.0
    %180 = vmatprep.subr.mxu0 0.0
    %181 = vmatpush1.msra.mxu0 0.0
    %182 = vmatprep.subr.mxu0 0.0
    %183 = vmatpush1.msra.mxu0 0.0
    %184 = vmatprep.subr.mxu0 0.0
    %185 = vmatpush1.msra.mxu0 0.0
    %186 = vmatprep.subr.mxu0 0.0
    %187 = vmatpush1.msra.mxu0 0.0
    %188 = vmatprep.subr.mxu0 0.0
    %189 = vmatpush1.msra.mxu0 0.0
    %190 = vmatprep.subr.mxu0 0.0
    %191 = vmatpush1.msra.mxu0 0.0
    %192 = vmatprep.subr.mxu0 0.0
    %193 = vmatpush1.msra.mxu0 0.0
    %194 = vmatprep.subr.mxu0 0.0
    %195 = vmatpush1.msra.mxu0 0.0
    %196 = vmatprep.subr.mxu0 0.0
    %197 = vmatpush1.msra.mxu0 0.0
    %198 = vmatprep.subr.mxu0 0.0
    %199 = vmatpush1.msra.mxu0 0.0
    %200 = vmatprep.subr.mxu0 0.0
    %201 = vmatpush1.msra.mxu0 0.0
    %202 = vmatprep.subr.mxu0 0.0
    %203 = vmatpush1.msra.mxu0 0.0
    %204 = vmatprep.subr.mxu0 0.0
    %205 = vmatpush1.msra.mxu0 0.0
    %206 = vmatprep.subr.mxu0 0.0
    %207 = vmatpush1.msra.mxu0 0.0
    %208 = vmatprep.subr.mxu0 0.0
    %209 = vmatpush1.msra.mxu0 0.0
    %210 = vmatprep.subr.mxu0 0.0
    %211 = vmatpush1.msra.mxu0 0.0
    %212 = vmatprep.subr.mxu0 0.0
    %213 = vmatpush1.msra.mxu0 0.0
    %214 = vmatprep.subr.mxu0 0.0
    %215 = vmatpush1.msra.mxu0 0.0
    %216 = vmatprep.subr.mxu0 0.0
    %217 = vmatpush1.msra.mxu0 0.0
    %218 = vmatprep.subr.mxu0 0.0
    %219 = vmatpush1.msra.mxu0 0.0
    %220 = vmatprep.subr.mxu0 0.0
    %221 = vmatpush1.msra.mxu0 0.0
    %222 = vmatprep.subr.mxu0 0.0
    %223 = vmatpush1.msra.mxu0 0.0
    %224 = vmatprep.subr.mxu0 0.0
    %225 = vmatpush1.msra.mxu0 0.0
    %226 = vmatprep.subr.mxu0 0.0
    %227 = vmatpush1.msra.mxu0 0.0
    %228 = vmatprep.subr.mxu0 0.0
    %229 = vmatpush1.msra.mxu0 0.0
    %230 = vmatprep.subr.mxu0 0.0
    %231 = vmatpush1.msra.mxu0 0.0
    %232 = vmatprep.subr.mxu0 0.0
    %233 = vmatpush1.msra.mxu0 0.0
    %234 = vmatprep.subr.mxu0 0.0
    %235 = vmatpush1.msra.mxu0 0.0
    %236 = vmatprep.mubr.f32.mxu0 0.0
    %237 = vmatmul.mubr.f32.gmra.mrb[0].mxu0 %v164
    %v238 = vpop.f32.mrb[0].mxu0
    %v239 = vadd.f32 0.0, %v238
    %v240 = vpop.f32.mrb[0].mxu0
    %v241 = vadd.f32 0.0, %v240
    %242 = vmatprep.mubr.f32.mxu0 0.0
    %243 = vmatmul.mubr.f32.gmra.mrb[0].mxu0 %v167
    %v244 = vpop.f32.mrb[0].mxu0
    %v245 = vadd.f32 0.0, %v244
    %v246 = vpop.f32.mrb[0].mxu0
    %v247 = vadd.f32 0.0, %v246
    %248 = vmatprep.mubr.f32.mxu0 0.0
    %249 = vmatmul.mubr.f32.gmra.mrb[0].mxu0 %v170
    %v250 = vpop.f32.mrb[0].mxu0
    %v251 = vpop.f32.mrb[0].mxu0
    %252 = vdwg.mxu0
    %253 = vmatprep.subr.mxu0 %v149
    %254 = vmatpush1.msra.mxu0 %v148
    %255 = vmatprep.subr.mxu0 0.0
    %256 = vmatpush1.msra.mxu0 0.0
    %257 = vmatprep.subr.mxu0 0.0
    %258 = vmatpush1.msra.mxu0 0.0
    %259 = vmatprep.subr.mxu0 0.0
    %260 = vmatpush1.msra.mxu0 0.0
    %261 = vmatprep.subr.mxu0 0.0
    %262 = vmatpush1.msra.mxu0 0.0
    %263 = vmatprep.subr.mxu0 0.0
    %264 = vmatpush1.msra.mxu0 0.0
    %265 = vmatprep.subr.mxu0 0.0
    %266 = vmatpush1.msra.mxu0 0.0
    %267 = vmatprep.subr.mxu0 0.0
    %268 = vmatpush1.msra.mxu0 0.0
    %269 = vmatprep.subr.mxu0 0.0
    %270 = vmatpush1.msra.mxu0 0.0
    %271 = vmatprep.subr.mxu0 0.0
    %272 = vmatpush1.msra.mxu0 0.0
    %273 = vmatprep.subr.mxu0 0.0
    %274 = vmatpush1.msra.mxu0 0.0
    %275 = vmatprep.subr.mxu0 0.0
    %276 = vmatpush1.msra.mxu0 0.0
    %277 = vmatprep.subr.mxu0 0.0
    %278 = vmatpush1.msra.mxu0 0.0
    %279 = vmatprep.subr.mxu0 0.0
    %280 = vmatpush1.msra.mxu0 0.0
    %281 = vmatprep.subr.mxu0 0.0
    %282 = vmatpush1.msra.mxu0 0.0
    %283 = vmatprep.subr.mxu0 0.0
    %284 = vmatpush1.msra.mxu0 0.0
    %285 = vmatprep.subr.mxu0 0.0
    %286 = vmatpush1.msra.mxu0 0.0
    %287 = vmatprep.subr.mxu0 0.0
    %288 = vmatpush1.msra.mxu0 0.0
    %289 = vmatprep.subr.mxu0 0.0
    %290 = vmatpush1.msra.mxu0 0.0
    %291 = vmatprep.subr.mxu0 0.0
    %292 = vmatpush1.msra.mxu0 0.0
    %293 = vmatprep.subr.mxu0 0.0
    %294 = vmatpush1.msra.mxu0 0.0
    %295 = vmatprep.subr.mxu0 0.0
    %296 = vmatpush1.msra.mxu0 0.0
    %297 = vmatprep.subr.mxu0 0.0
    %298 = vmatpush1.msra.mxu0 0.0
    %299 = vmatprep.subr.mxu0 0.0
    %300 = vmatpush1.msra.mxu0 0.0
    %301 = vmatprep.subr.mxu0 0.0
    %302 = vmatpush1.msra.mxu0 0.0
    %303 = vmatprep.subr.mxu0 0.0
    %304 = vmatpush1.msra.mxu0 0.0
    %305 = vmatprep.subr.mxu0 0.0
    %306 = vmatpush1.msra.mxu0 0.0
    %307 = vmatprep.subr.mxu0 0.0
    %308 = vmatpush1.msra.mxu0 0.0
    %309 = vmatprep.subr.mxu0 0.0
    %310 = vmatpush1.msra.mxu0 0.0
    %311 = vmatprep.subr.mxu0 0.0
    %312 = vmatpush1.msra.mxu0 0.0
    %313 = vmatprep.subr.mxu0 0.0
    %314 = vmatpush1.msra.mxu0 0.0
    %315 = vmatprep.subr.mxu0 0.0
    %316 = vmatpush1.msra.mxu0 0.0
    %317 = vmatprep.mubr.f32.mxu0 0.0
    %318 = vmatmul.mubr.f32.gmra.mrb[0].mxu0 %v164
    %v319 = vpop.f32.mrb[0].mxu0
    %v320 = vadd.f32 0.0, %v319
    %v321 = vpop.f32.mrb[0].mxu0
    %v322 = vadd.f32 0.0, %v321
    %323 = vmatprep.mubr.f32.mxu0 0.0
    %324 = vmatmul.mubr.f32.gmra.mrb[0].mxu0 %v167
    %v325 = vpop.f32.mrb[0].mxu0
    %v326 = vadd.f32 0.0, %v325
    %v327 = vpop.f32.mrb[0].mxu0
    %v328 = vadd.f32 0.0, %v327
    %329 = vmatprep.mubr.f32.mxu0 0.0
    %330 = vmatmul.mubr.f32.gmra.mrb[0].mxu0 %v170
    %v331 = vpop.f32.mrb[0].mxu0
    %v332 = vpop.f32.mrb[0].mxu0
    %333 = vdwg.mxu0
    %334 = vmatprep.subr.mxu0 %v151
    %335 = vmatpush1.msra.mxu0 %v150
    %336 = vmatprep.subr.mxu0 0.0
    %337 = vmatpush1.msra.mxu0 0.0
    %338 = vmatprep.subr.mxu0 0.0
    %339 = vmatpush1.msra.mxu0 0.0
    %340 = vmatprep.subr.mxu0 0.0
    %341 = vmatpush1.msra.mxu0 0.0
    %342 = vmatprep.subr.mxu0 0.0
    %343 = vmatpush1.msra.mxu0 0.0
    %344 = vmatprep.subr.mxu0 0.0
    %345 = vmatpush1.msra.mxu0 0.0
    %346 = vmatprep.subr.mxu0 0.0
    %347 = vmatpush1.msra.mxu0 0.0
    %348 = vmatprep.subr.mxu0 0.0
    %349 = vmatpush1.msra.mxu0 0.0
    %350 = vmatprep.subr.mxu0 0.0
    %351 = vmatpush1.msra.mxu0 0.0
    %352 = vmatprep.subr.mxu0 0.0
    %353 = vmatpush1.msra.mxu0 0.0
    %354 = vmatprep.subr.mxu0 0.0
    %355 = vmatpush1.msra.mxu0 0.0
    %356 = vmatprep.subr.mxu0 0.0
    %357 = vmatpush1.msra.mxu0 0.0
    %358 = vmatprep.subr.mxu0 0.0
    %359 = vmatpush1.msra.mxu0 0.0
    %360 = vmatprep.subr.mxu0 0.0
    %361 = vmatpush1.msra.mxu0 0.0
    %362 = vmatprep.subr.mxu0 0.0
    %363 = vmatpush1.msra.mxu0 0.0
    %364 = vmatprep.subr.mxu0 0.0
    %365 = vmatpush1.msra.mxu0 0.0
    %366 = vmatprep.subr.mxu0 0.0
    %367 = vmatpush1.msra.mxu0 0.0
    %368 = vmatprep.subr.mxu0 0.0
    %369 = vmatpush1.msra.mxu0 0.0
    %370 = vmatprep.subr.mxu0 0.0
    %371 = vmatpush1.msra.mxu0 0.0
    %372 = vmatprep.subr.mxu0 0.0
    %373 = vmatpush1.msra.mxu0 0.0
    %374 = vmatprep.subr.mxu0 0.0
    %375 = vmatpush1.msra.mxu0 0.0
    %376 = vmatprep.subr.mxu0 0.0
    %377 = vmatpush1.msra.mxu0 0.0
    %378 = vmatprep.subr.mxu0 0.0
    %379 = vmatpush1.msra.mxu0 0.0
    %380 = vmatprep.subr.mxu0 0.0
    %381 = vmatpush1.msra.mxu0 0.0
    %382 = vmatprep.subr.mxu0 0.0
    %383 = vmatpush1.msra.mxu0 0.0
    %384 = vmatprep.subr.mxu0 0.0
    %385 = vmatpush1.msra.mxu0 0.0
    %386 = vmatprep.subr.mxu0 0.0
    %387 = vmatpush1.msra.mxu0 0.0
    %388 = vmatprep.subr.mxu0 0.0
    %389 = vmatpush1.msra.mxu0 0.0
    %390 = vmatprep.subr.mxu0 0.0
    %391 = vmatpush1.msra.mxu0 0.0
    %392 = vmatprep.subr.mxu0 0.0
    %393 = vmatpush1.msra.mxu0 0.0
    %394 = vmatprep.subr.mxu0 0.0
    %395 = vmatpush1.msra.mxu0 0.0
    %396 = vmatprep.subr.mxu0 0.0
    %397 = vmatpush1.msra.mxu0 0.0
    %398 = vmatprep.mubr.f32.mxu0 0.0
    %399 = vmatmul.mubr.f32.gmra.mrb[0].mxu0 %v164
    %v400 = vpop.f32.mrb[0].mxu0
    %v401 = vadd.f32 0.0, %v400
    %v402 = vpop.f32.mrb[0].mxu0
    %v403 = vadd.f32 0.0, %v402
    %404 = vmatprep.mubr.f32.mxu0 0.0
    %405 = vmatmul.mubr.f32.gmra.mrb[0].mxu0 %v167
    %v406 = vpop.f32.mrb[0].mxu0
    %v407 = vadd.f32 0.0, %v406
    %v408 = vpop.f32.mrb[0].mxu0
    %v409 = vadd.f32 0.0, %v408
    %410 = vmatprep.mubr.f32.mxu0 0.0
    %411 = vmatmul.mubr.f32.gmra.mrb[0].mxu0 %v170
    %v412 = vpop.f32.mrb[0].mxu0
    %v413 = vpop.f32.mrb[0].mxu0
    %414 = vdwg.mxu0
    %415 = vmatprep.subr.mxu0 %v153
    %416 = vmatpush1.msra.mxu0 %v152
    %417 = vmatprep.subr.mxu0 0.0
    %418 = vmatpush1.msra.mxu0 0.0
    %419 = vmatprep.subr.mxu0 0.0
    %420 = vmatpush1.msra.mxu0 0.0
    %421 = vmatprep.subr.mxu0 0.0
    %422 = vmatpush1.msra.mxu0 0.0
    %423 = vmatprep.subr.mxu0 0.0
    %424 = vmatpush1.msra.mxu0 0.0
    %425 = vmatprep.subr.mxu0 0.0
    %426 = vmatpush1.msra.mxu0 0.0
    %427 = vmatprep.subr.mxu0 0.0
    %428 = vmatpush1.msra.mxu0 0.0
    %429 = vmatprep.subr.mxu0 0.0
    %430 = vmatpush1.msra.mxu0 0.0
    %431 = vmatprep.subr.mxu0 0.0
    %432 = vmatpush1.msra.mxu0 0.0
    %433 = vmatprep.subr.mxu0 0.0
    %434 = vmatpush1.msra.mxu0 0.0
    %435 = vmatprep.subr.mxu0 0.0
    %436 = vmatpush1.msra.mxu0 0.0
    %437 = vmatprep.subr.mxu0 0.0
    %438 = vmatpush1.msra.mxu0 0.0
    %439 = vmatprep.subr.mxu0 0.0
    %440 = vmatpush1.msra.mxu0 0.0
    %441 = vmatprep.subr.mxu0 0.0
    %442 = vmatpush1.msra.mxu0 0.0
    %443 = vmatprep.subr.mxu0 0.0
    %444 = vmatpush1.msra.mxu0 0.0
    %445 = vmatprep.subr.mxu0 0.0
    %446 = vmatpush1.msra.mxu0 0.0
    %447 = vmatprep.subr.mxu0 0.0
    %448 = vmatpush1.msra.mxu0 0.0
    %449 = vmatprep.subr.mxu0 0.0
    %450 = vmatpush1.msra.mxu0 0.0
    %451 = vmatprep.subr.mxu0 0.0
    %452 = vmatpush1.msra.mxu0 0.0
    %453 = vmatprep.subr.mxu0 0.0
    %454 = vmatpush1.msra.mxu0 0.0
    %455 = vmatprep.subr.mxu0 0.0
    %456 = vmatpush1.msra.mxu0 0.0
    %457 = vmatprep.subr.mxu0 0.0
    %458 = vmatpush1.msra.mxu0 0.0
    %459 = vmatprep.subr.mxu0 0.0
    %460 = vmatpush1.msra.mxu0 0.0
    %461 = vmatprep.subr.mxu0 0.0
    %462 = vmatpush1.msra.mxu0 0.0
    %463 = vmatprep.subr.mxu0 0.0
    %464 = vmatpush1.msra.mxu0 0.0
    %465 = vmatprep.subr.mxu0 0.0
    %466 = vmatpush1.msra.mxu0 0.0
    %467 = vmatprep.subr.mxu0 0.0
    %468 = vmatpush1.msra.mxu0 0.0
    %469 = vmatprep.subr.mxu0 0.0
    %470 = vmatpush1.msra.mxu0 0.0
    %471 = vmatprep.subr.mxu0 0.0
    %472 = vmatpush1.msra.mxu0 0.0
    %473 = vmatprep.subr.mxu0 0.0
    %474 = vmatpush1.msra.mxu0 0.0
    %475 = vmatprep.subr.mxu0 0.0
    %476 = vmatpush1.msra.mxu0 0.0
    %477 = vmatprep.subr.mxu0 0.0
    %478 = vmatpush1.msra.mxu0 0.0
    %479 = vmatprep.mubr.f32.mxu0 0.0
    %480 = vmatmul.mubr.f32.gmra.mrb[0].mxu0 %v164
    %v481 = vpop.f32.mrb[0].mxu0
    %v482 = vadd.f32 0.0, %v481
    %v483 = vpop.f32.mrb[0].mxu0
    %v484 = vadd.f32 0.0, %v483
    %485 = vmatprep.mubr.f32.mxu0 0.0
    %486 = vmatmul.mubr.f32.gmra.mrb[0].mxu0 %v167
    %v487 = vpop.f32.mrb[0].mxu0
    %v488 = vadd.f32 0.0, %v487
    %v489 = vpop.f32.mrb[0].mxu0
    %v490 = vadd.f32 0.0, %v489
    %491 = vmatprep.mubr.f32.mxu0 0.0
    %492 = vmatmul.mubr.f32.gmra.mrb[0].mxu0 %v170
    %v493 = vpop.f32.mrb[0].mxu0
    %v494 = vpop.f32.mrb[0].mxu0
    %495 = vdwg.mxu0
    %496 = vmatprep.subr.mxu0 %v155
    %497 = vmatpush1.msra.mxu0 %v154
    %498 = vmatprep.subr.mxu0 0.0
    %499 = vmatpush1.msra.mxu0 0.0
    %500 = vmatprep.subr.mxu0 0.0
    %501 = vmatpush1.msra.mxu0 0.0
    %502 = vmatprep.subr.mxu0 0.0
    %503 = vmatpush1.msra.mxu0 0.0
    %504 = vmatprep.subr.mxu0 0.0
    %505 = vmatpush1.msra.mxu0 0.0
    %506 = vmatprep.subr.mxu0 0.0
    %507 = vmatpush1.msra.mxu0 0.0
    %508 = vmatprep.subr.mxu0 0.0
    %509 = vmatpush1.msra.mxu0 0.0
    %510 = vmatprep.subr.mxu0 0.0
    %511 = vmatpush1.msra.mxu0 0.0
    %512 = vmatprep.subr.mxu0 0.0
    %513 = vmatpush1.msra.mxu0 0.0
    %514 = vmatprep.subr.mxu0 0.0
    %515 = vmatpush1.msra.mxu0 0.0
    %516 = vmatprep.subr.mxu0 0.0
    %517 = vmatpush1.msra.mxu0 0.0
    %518 = vmatprep.subr.mxu0 0.0
    %519 = vmatpush1.msra.mxu0 0.0
    %520 = vmatprep.subr.mxu0 0.0
    %521 = vmatpush1.msra.mxu0 0.0
    %522 = vmatprep.subr.mxu0 0.0
    %523 = vmatpush1.msra.mxu0 0.0
    %524 = vmatprep.subr.mxu0 0.0
    %525 = vmatpush1.msra.mxu0 0.0
    %526 = vmatprep.subr.mxu0 0.0
    %527 = vmatpush1.msra.mxu0 0.0
    %528 = vmatprep.subr.mxu0 0.0
    %529 = vmatpush1.msra.mxu0 0.0
    %530 = vmatprep.subr.mxu0 0.0
    %531 = vmatpush1.msra.mxu0 0.0
    %532 = vmatprep.subr.mxu0 0.0
    %533 = vmatpush1.msra.mxu0 0.0
    %534 = vmatprep.subr.mxu0 0.0
    %535 = vmatpush1.msra.mxu0 0.0
    %536 = vmatprep.subr.mxu0 0.0
    %537 = vmatpush1.msra.mxu0 0.0
    %538 = vmatprep.subr.mxu0 0.0
    %539 = vmatpush1.msra.mxu0 0.0
    %540 = vmatprep.subr.mxu0 0.0
    %541 = vmatpush1.msra.mxu0 0.0
    %542 = vmatprep.subr.mxu0 0.0
    %543 = vmatpush1.msra.mxu0 0.0
    %544 = vmatprep.subr.mxu0 0.0
    %545 = vmatpush1.msra.mxu0 0.0
    %546 = vmatprep.subr.mxu0 0.0
    %547 = vmatpush1.msra.mxu0 0.0
    %548 = vmatprep.subr.mxu0 0.0
    %549 = vmatpush1.msra.mxu0 0.0
    %550 = vmatprep.subr.mxu0 0.0
    %551 = vmatpush1.msra.mxu0 0.0
    %552 = vmatprep.subr.mxu0 0.0
    %553 = vmatpush1.msra.mxu0 0.0
    %554 = vmatprep.subr.mxu0 0.0
    %555 = vmatpush1.msra.mxu0 0.0
    %556 = vmatprep.subr.mxu0 0.0
    %557 = vmatpush1.msra.mxu0 0.0
    %558 = vmatprep.subr.mxu0 0.0
    %559 = vmatpush1.msra.mxu0 0.0
    %560 = vmatprep.mubr.f32.mxu0 0.0
    %561 = vmatmul.mubr.f32.gmra.mrb[0].mxu0 %v164
    %v562 = vpop.f32.mrb[0].mxu0
    %v563 = vadd.f32 0.0, %v562
    %v564 = vpop.f32.mrb[0].mxu0
    %v565 = vadd.f32 0.0, %v564
    %566 = vmatprep.mubr.f32.mxu0 0.0
    %567 = vmatmul.mubr.f32.gmra.mrb[0].mxu0 %v167
    %v568 = vpop.f32.mrb[0].mxu0
    %v569 = vadd.f32 0.0, %v568
    %v570 = vpop.f32.mrb[0].mxu0
    %v571 = vadd.f32 0.0, %v570
    %572 = vmatprep.mubr.f32.mxu0 0.0
    %573 = vmatmul.mubr.f32.gmra.mrb[0].mxu0 %v170
    %v574 = vpop.f32.mrb[0].mxu0
    %v575 = vpop.f32.mrb[0].mxu0
    %576 = vdwg.mxu0
    %577 = vmatprep.subr.mxu0 %v157
    %578 = vmatpush1.msra.mxu0 %v156
    %579 = vmatprep.subr.mxu0 0.0
    %580 = vmatpush1.msra.mxu0 0.0
    %581 = vmatprep.subr.mxu0 0.0
    %582 = vmatpush1.msra.mxu0 0.0
    %583 = vmatprep.subr.mxu0 0.0
    %584 = vmatpush1.msra.mxu0 0.0
    %585 = vmatprep.subr.mxu0 0.0
    %586 = vmatpush1.msra.mxu0 0.0
    %587 = vmatprep.subr.mxu0 0.0
    %588 = vmatpush1.msra.mxu0 0.0
    %589 = vmatprep.subr.mxu0 0.0
    %590 = vmatpush1.msra.mxu0 0.0
    %591 = vmatprep.subr.mxu0 0.0
    %592 = vmatpush1.msra.mxu0 0.0
    %593 = vmatprep.subr.mxu0 0.0
    %594 = vmatpush1.msra.mxu0 0.0
    %595 = vmatprep.subr.mxu0 0.0
    %596 = vmatpush1.msra.mxu0 0.0
    %597 = vmatprep.subr.mxu0 0.0
    %598 = vmatpush1.msra.mxu0 0.0
    %599 = vmatprep.subr.mxu0 0.0
    %600 = vmatpush1.msra.mxu0 0.0
    %601 = vmatprep.subr.mxu0 0.0
    %602 = vmatpush1.msra.mxu0 0.0
    %603 = vmatprep.subr.mxu0 0.0
    %604 = vmatpush1.msra.mxu0 0.0
    %605 = vmatprep.subr.mxu0 0.0
    %606 = vmatpush1.msra.mxu0 0.0
    %607 = vmatprep.subr.mxu0 0.0
    %608 = vmatpush1.msra.mxu0 0.0
    %609 = vmatprep.subr.mxu0 0.0
    %610 = vmatpush1.msra.mxu0 0.0
    %611 = vmatprep.subr.mxu0 0.0
    %612 = vmatpush1.msra.mxu0 0.0
    %613 = vmatprep.subr.mxu0 0.0
    %614 = vmatpush1.msra.mxu0 0.0
    %615 = vmatprep.subr.mxu0 0.0
    %616 = vmatpush1.msra.mxu0 0.0
    %617 = vmatprep.subr.mxu0 0.0
    %618 = vmatpush1.msra.mxu0 0.0
    %619 = vmatprep.subr.mxu0 0.0
    %620 = vmatpush1.msra.mxu0 0.0
    %621 = vmatprep.subr.mxu0 0.0
    %622 = vmatpush1.msra.mxu0 0.0
    %623 = vmatprep.subr.mxu0 0.0
    %624 = vmatpush1.msra.mxu0 0.0
    %625 = vmatprep.subr.mxu0 0.0
    %626 = vmatpush1.msra.mxu0 0.0
    %627 = vmatprep.subr.mxu0 0.0
    %628 = vmatpush1.msra.mxu0 0.0
    %629 = vmatprep.subr.mxu0 0.0
    %630 = vmatpush1.msra.mxu0 0.0
    %631 = vmatprep.subr.mxu0 0.0
    %632 = vmatpush1.msra.mxu0 0.0
    %633 = vmatprep.subr.mxu0 0.0
    %634 = vmatpush1.msra.mxu0 0.0
    %635 = vmatprep.subr.mxu0 0.0
    %636 = vmatpush1.msra.mxu0 0.0
    %637 = vmatprep.subr.mxu0 0.0
    %638 = vmatpush1.msra.mxu0 0.0
    %639 = vmatprep.subr.mxu0 0.0
    %640 = vmatpush1.msra.mxu0 0.0
    %641 = vmatprep.mubr.f32.mxu0 0.0
    %642 = vmatmul.mubr.f32.gmra.mrb[0].mxu0 %v164
    %v643 = vpop.f32.mrb[0].mxu0
    %v644 = vadd.f32 0.0, %v643
    %v645 = vpop.f32.mrb[0].mxu0
    %v646 = vadd.f32 0.0, %v645
    %647 = vmatprep.mubr.f32.mxu0 0.0
    %648 = vmatmul.mubr.f32.gmra.mrb[0].mxu0 %v167
    %v649 = vpop.f32.mrb[0].mxu0
    %v650 = vadd.f32 0.0, %v649
    %v651 = vpop.f32.mrb[0].mxu0
    %v652 = vadd.f32 0.0, %v651
    %653 = vmatprep.mubr.f32.mxu0 0.0
    %654 = vmatmul.mubr.f32.gmra.mrb[0].mxu0 %v170
    %v655 = vpop.f32.mrb[0].mxu0
    %v656 = vpop.f32.mrb[0].mxu0
    %657 = vdwg.mxu0
    %658 = vmatprep.subr.mxu0 %v159
    %659 = vmatpush1.msra.mxu0 %v158
    %660 = vmatprep.subr.mxu0 0.0
    %661 = vmatpush1.msra.mxu0 0.0
    %662 = vmatprep.subr.mxu0 0.0
    %663 = vmatpush1.msra.mxu0 0.0
    %664 = vmatprep.subr.mxu0 0.0
    %665 = vmatpush1.msra.mxu0 0.0
    %666 = vmatprep.subr.mxu0 0.0
    %667 = vmatpush1.msra.mxu0 0.0
    %668 = vmatprep.subr.mxu0 0.0
    %669 = vmatpush1.msra.mxu0 0.0
    %670 = vmatprep.subr.mxu0 0.0
    %671 = vmatpush1.msra.mxu0 0.0
    %672 = vmatprep.subr.mxu0 0.0
    %673 = vmatpush1.msra.mxu0 0.0
    %674 = vmatprep.subr.mxu0 0.0
    %675 = vmatpush1.msra.mxu0 0.0
    %676 = vmatprep.subr.mxu0 0.0
    %677 = vmatpush1.msra.mxu0 0.0
    %678 = vmatprep.subr.mxu0 0.0
    %679 = vmatpush1.msra.mxu0 0.0
    %680 = vmatprep.subr.mxu0 0.0
    %681 = vmatpush1.msra.mxu0 0.0
    %682 = vmatprep.subr.mxu0 0.0
    %683 = vmatpush1.msra.mxu0 0.0
    %684 = vmatprep.subr.mxu0 0.0
    %685 = vmatpush1.msra.mxu0 0.0
    %686 = vmatprep.subr.mxu0 0.0
    %687 = vmatpush1.msra.mxu0 0.0
    %688 = vmatprep.subr.mxu0 0.0
    %689 = vmatpush1.msra.mxu0 0.0
    %690 = vmatprep.subr.mxu0 0.0
    %691 = vmatpush1.msra.mxu0 0.0
    %692 = vmatprep.subr.mxu0 0.0
    %693 = vmatpush1.msra.mxu0 0.0
    %694 = vmatprep.subr.mxu0 0.0
    %695 = vmatpush1.msra.mxu0 0.0
    %696 = vmatprep.subr.mxu0 0.0
    %697 = vmatpush1.msra.mxu0 0.0
    %698 = vmatprep.subr.mxu0 0.0
    %699 = vmatpush1.msra.mxu0 0.0
    %700 = vmatprep.subr.mxu0 0.0
    %701 = vmatpush1.msra.mxu0 0.0
    %702 = vmatprep.subr.mxu0 0.0
    %703 = vmatpush1.msra.mxu0 0.0
    %704 = vmatprep.subr.mxu0 0.0
    %705 = vmatpush1.msra.mxu0 0.0
    %706 = vmatprep.subr.mxu0 0.0
    %707 = vmatpush1.msra.mxu0 0.0
    %708 = vmatprep.subr.mxu0 0.0
    %709 = vmatpush1.msra.mxu0 0.0
    %710 = vmatprep.subr.mxu0 0.0
    %711 = vmatpush1.msra.mxu0 0.0
    %712 = vmatprep.subr.mxu0 0.0
    %713 = vmatpush1.msra.mxu0 0.0
    %714 = vmatprep.subr.mxu0 0.0
    %715 = vmatpush1.msra.mxu0 0.0
    %716 = vmatprep.subr.mxu0 0.0
    %717 = vmatpush1.msra.mxu0 0.0
    %718 = vmatprep.subr.mxu0 0.0
    %719 = vmatpush1.msra.mxu0 0.0
    %720 = vmatprep.subr.mxu0 0.0
    %721 = vmatpush1.msra.mxu0 0.0
    %722 = vmatprep.mubr.f32.mxu0 0.0
    %723 = vmatmul.mubr.f32.gmra.mrb[0].mxu0 %v164
    %v724 = vpop.f32.mrb[0].mxu0
    %v725 = vadd.f32 0.0, %v724
    %v726 = vpop.f32.mrb[0].mxu0
    %v727 = vadd.f32 0.0, %v726
    %728 = vmatprep.mubr.f32.mxu0 0.0
    %729 = vmatmul.mubr.f32.gmra.mrb[0].mxu0 %v167
    %v730 = vpop.f32.mrb[0].mxu0
    %v731 = vadd.f32 0.0, %v730
    %v732 = vpop.f32.mrb[0].mxu0
    %v733 = vadd.f32 0.0, %v732
    %734 = vmatprep.mubr.f32.mxu0 0.0
    %735 = vmatmul.mubr.f32.gmra.mrb[0].mxu0 %v170
    %v736 = vpop.f32.mrb[0].mxu0
    %v737 = vpop.f32.mrb[0].mxu0
    %738 = vdwg.mxu0
    %739 = vmatprep.subr.mxu0 %v161
    %740 = vmatpush1.msra.mxu0 %v160
    %741 = vmatprep.subr.mxu0 0.0
    %742 = vmatpush1.msra.mxu0 0.0
    %743 = vmatprep.subr.mxu0 0.0
    %744 = vmatpush1.msra.mxu0 0.0
    %745 = vmatprep.subr.mxu0 0.0
    %746 = vmatpush1.msra.mxu0 0.0
    %747 = vmatprep.subr.mxu0 0.0
    %748 = vmatpush1.msra.mxu0 0.0
    %749 = vmatprep.subr.mxu0 0.0
    %750 = vmatpush1.msra.mxu0 0.0
    %751 = vmatprep.subr.mxu0 0.0
    %752 = vmatpush1.msra.mxu0 0.0
    %753 = vmatprep.subr.mxu0 0.0
    %754 = vmatpush1.msra.mxu0 0.0
    %755 = vmatprep.subr.mxu0 0.0
    %756 = vmatpush1.msra.mxu0 0.0
    %757 = vmatprep.subr.mxu0 0.0
    %758 = vmatpush1.msra.mxu0 0.0
    %759 = vmatprep.subr.mxu0 0.0
    %760 = vmatpush1.msra.mxu0 0.0
    %761 = vmatprep.subr.mxu0 0.0
    %762 = vmatpush1.msra.mxu0 0.0
    %763 = vmatprep.subr.mxu0 0.0
    %764 = vmatpush1.msra.mxu0 0.0
    %765 = vmatprep.subr.mxu0 0.0
    %766 = vmatpush1.msra.mxu0 0.0
    %767 = vmatprep.subr.mxu0 0.0
    %768 = vmatpush1.msra.mxu0 0.0
    %769 = vmatprep.subr.mxu0 0.0
    %770 = vmatpush1.msra.mxu0 0.0
    %771 = vmatprep.subr.mxu0 0.0
    %772 = vmatpush1.msra.mxu0 0.0
    %773 = vmatprep.subr.mxu0 0.0
    %774 = vmatpush1.msra.mxu0 0.0
    %775 = vmatprep.subr.mxu0 0.0
    %776 = vmatpush1.msra.mxu0 0.0
    %777 = vmatprep.subr.mxu0 0.0
    %778 = vmatpush1.msra.mxu0 0.0
    %779 = vmatprep.subr.mxu0 0.0
    %780 = vmatpush1.msra.mxu0 0.0
    %781 = vmatprep.subr.mxu0 0.0
    %782 = vmatpush1.msra.mxu0 0.0
    %783 = vmatprep.subr.mxu0 0.0
    %784 = vmatpush1.msra.mxu0 0.0
    %785 = vmatprep.subr.mxu0 0.0
    %786 = vmatpush1.msra.mxu0 0.0
    %787 = vmatprep.subr.mxu0 0.0
    %788 = vmatpush1.msra.mxu0 0.0
    %789 = vmatprep.subr.mxu0 0.0
    %790 = vmatpush1.msra.mxu0 0.0
    %791 = vmatprep.subr.mxu0 0.0
    %792 = vmatpush1.msra.mxu0 0.0
    %793 = vmatprep.subr.mxu0 0.0
    %794 = vmatpush1.msra.mxu0 0.0
    %795 = vmatprep.subr.mxu0 0.0
    %796 = vmatpush1.msra.mxu0 0.0
    %797 = vmatprep.subr.mxu0 0.0
    %798 = vmatpush1.msra.mxu0 0.0
    %799 = vmatprep.subr.mxu0 0.0
    %800 = vmatpush1.msra.mxu0 0.0
    %801 = vmatprep.subr.mxu0 0.0
    %802 = vmatpush1.msra.mxu0 0.0
    %803 = vmatprep.mubr.f32.mxu0 0.0
    %804 = vmatmul.mubr.f32.gmra.mrb[0].mxu0 %v164
    %v805 = vpop.f32.mrb[0].mxu0
    %v806 = vadd.f32 0.0, %v805
    %v807 = vpop.f32.mrb[0].mxu0
    %v808 = vadd.f32 0.0, %v807
    %809 = vmatprep.mubr.f32.mxu0 0.0
    %810 = vmatmul.mubr.f32.gmra.mrb[0].mxu0 %v167
    %v811 = vpop.f32.mrb[0].mxu0
    %v812 = vadd.f32 0.0, %v811
    %v813 = vpop.f32.mrb[0].mxu0
    %v814 = vadd.f32 0.0, %v813
    %815 = vmatprep.mubr.f32.mxu0 0.0
    %816 = vmatmul.mubr.f32.gmra.mrb[0].mxu0 %v170
    %v817 = vpop.f32.mrb[0].mxu0
    %v818 = vpop.f32.mrb[0].mxu0
    %819 = vdwg.mxu0
    %v820 = vmul.f32 %v239, %v64
    %v821 = vmul.f32 %v241, %v68
    %v822 = vmul.f32 %v320, %v72
    %v823 = vmul.f32 %v322, %v76
    %v824 = vmul.f32 %v401, %v80
    %v825 = vmul.f32 %v403, %v84
    %v826 = vmul.f32 %v482, %v88
    %v827 = vmul.f32 %v484, %v92
    %v828 = vmul.f32 %v563, %v96
    %v829 = vmul.f32 %v565, %v100
    %v830 = vmul.f32 %v644, %v104
    %v831 = vmul.f32 %v646, %v108
    %v832 = vmul.f32 %v725, %v112
    %v833 = vmul.f32 %v727, %v116
    %v834 = vmul.f32 %v806, %v120
    %v835 = vmul.f32 %v808, %v124
    %v836 = vadd.f32 %v820, %v822
    %v837 = vadd.f32 %v821, %v823
    %v838 = vadd.f32 %v836, %v824
    %v839 = vadd.f32 %v837, %v825
    %v840 = vadd.f32 %v838, %v826
    %v841 = vadd.f32 %v839, %v827
    %v842 = vadd.f32 %v828, %v830
    %v843 = vadd.f32 %v829, %v831
    %v844 = vadd.f32 %v842, %v832
    %v845 = vadd.f32 %v843, %v833
    %v846 = vadd.f32 %v844, %v834
    %v847 = vadd.f32 %v845, %v835
    %v848 = vadd.f32 %v245, %v144
    %v849 = vadd.f32 %v247, %v144
    %v850 = vadd.f32 %v326, %v144
    %v851 = vadd.f32 %v328, %v144
    %v852 = vadd.f32 %v407, %v144
    %v853 = vadd.f32 %v409, %v144
    %v854 = vadd.f32 %v488, %v144
    %v855 = vadd.f32 %v490, %v144
    %v856 = vadd.f32 %v569, %v144
    %v857 = vadd.f32 %v571, %v144
    %v858 = vadd.f32 %v650, %v144
    %v859 = vadd.f32 %v652, %v144
    %v860 = vadd.f32 %v731, %v144
    %v861 = vadd.f32 %v733, %v144
    %v862 = vadd.f32 %v812, %v144
    %v863 = vadd.f32 %v814, %v144
    %v864 = vsub.f32 %v840, %v820
    %v865 = vsub.f32 %v841, %v821
    %v866 = vsub.f32 %v840, %v822
    %v867 = vsub.f32 %v841, %v823
    %v868 = vsub.f32 %v840, %v824
    %v869 = vsub.f32 %v841, %v825
    %v870 = vsub.f32 %v840, %v826
    %v871 = vsub.f32 %v841, %v827
    %v872 = vsub.f32 %v846, %v828
    %v873 = vsub.f32 %v847, %v829
    %v874 = vsub.f32 %v846, %v830
    %v875 = vsub.f32 %v847, %v831
    %v876 = vsub.f32 %v846, %v832
    %v877 = vsub.f32 %v847, %v833
    %v878 = vsub.f32 %v846, %v834
    %v879 = vsub.f32 %v847, %v835
    %v880 = vadd.f32 %v848, %v864
    %v881 = vadd.f32 %v849, %v865
    %v882 = vadd.f32 %v850, %v866
    %v883 = vadd.f32 %v851, %v867
    %v884 = vadd.f32 %v852, %v868
    %v885 = vadd.f32 %v853, %v869
    %v886 = vadd.f32 %v854, %v870
    %v887 = vadd.f32 %v855, %v871
    %v888 = vadd.f32 %v856, %v872
    %v889 = vadd.f32 %v857, %v873
    %v890 = vadd.f32 %v858, %v874
    %v891 = vadd.f32 %v859, %v875
    %v892 = vadd.f32 %v860, %v876
    %v893 = vadd.f32 %v861, %v877
    %v894 = vadd.f32 %v862, %v878
    %v895 = vadd.f32 %v863, %v879
    %v896 = vmax.f32 %v880, 0.0
    %v897 = vmax.f32 %v881, 0.0
    %v898 = vmax.f32 %v882, 0.0
    %v899 = vmax.f32 %v883, 0.0
    %v900 = vmax.f32 %v884, 0.0
    %v901 = vmax.f32 %v885, 0.0
    %v902 = vmax.f32 %v886, 0.0
    %v903 = vmax.f32 %v887, 0.0
    %v904 = vmax.f32 %v888, 0.0
    %v905 = vmax.f32 %v889, 0.0
    %v906 = vmax.f32 %v890, 0.0
    %v907 = vmax.f32 %v891, 0.0
    %v908 = vmax.f32 %v892, 0.0
    %v909 = vmax.f32 %v893, 0.0
    %v910 = vmax.f32 %v894, 0.0
    %v911 = vmax.f32 %v895, 0.0
    %912 = vmatprep.subr.mxu0 %v897
    %913 = vmatpush1.msra.mxu0 %v896
    %914 = vmatprep.subr.mxu0 0.0
    %915 = vmatpush1.msra.mxu0 0.0
    %916 = vmatprep.subr.mxu0 0.0
    %917 = vmatpush1.msra.mxu0 0.0
    %918 = vmatprep.subr.mxu0 0.0
    %919 = vmatpush1.msra.mxu0 0.0
    %920 = vmatprep.subr.mxu0 0.0
    %921 = vmatpush1.msra.mxu0 0.0
    %922 = vmatprep.subr.mxu0 0.0
    %923 = vmatpush1.msra.mxu0 0.0
    %924 = vmatprep.subr.mxu0 0.0
    %925 = vmatpush1.msra.mxu0 0.0
    %926 = vmatprep.subr.mxu0 0.0
    %927 = vmatpush1.msra.mxu0 0.0
    %928 = vmatprep.subr.mxu0 0.0
    %929 = vmatpush1.msra.mxu0 0.0
    %930 = vmatprep.subr.mxu0 0.0
    %931 = vmatpush1.msra.mxu0 0.0
    %932 = vmatprep.subr.mxu0 0.0
    %933 = vmatpush1.msra.mxu0 0.0
    %934 = vmatprep.subr.mxu0 0.0
    %935 = vmatpush1.msra.mxu0 0.0
    %936 = vmatprep.subr.mxu0 0.0
    %937 = vmatpush1.msra.mxu0 0.0
    %938 = vmatprep.subr.mxu0 0.0
    %939 = vmatpush1.msra.mxu0 0.0
    %940 = vmatprep.subr.mxu0 0.0
    %941 = vmatpush1.msra.mxu0 0.0
    %942 = vmatprep.subr.mxu0 0.0
    %943 = vmatpush1.msra.mxu0 0.0
    %944 = vmatprep.subr.mxu0 0.0
    %945 = vmatpush1.msra.mxu0 0.0
    %946 = vmatprep.subr.mxu0 0.0
    %947 = vmatpush1.msra.mxu0 0.0
    %948 = vmatprep.subr.mxu0 0.0
    %949 = vmatpush1.msra.mxu0 0.0
    %950 = vmatprep.subr.mxu0 0.0
    %951 = vmatpush1.msra.mxu0 0.0
    %952 = vmatprep.subr.mxu0 0.0
    %953 = vmatpush1.msra.mxu0 0.0
    %954 = vmatprep.subr.mxu0 0.0
    %955 = vmatpush1.msra.mxu0 0.0
    %956 = vmatprep.subr.mxu0 0.0
    %957 = vmatpush1.msra.mxu0 0.0
    %958 = vmatprep.subr.mxu0 0.0
    %959 = vmatpush1.msra.mxu0 0.0
    %960 = vmatprep.subr.mxu0 0.0
    %961 = vmatpush1.msra.mxu0 0.0
    %962 = vmatprep.subr.mxu0 0.0
    %963 = vmatpush1.msra.mxu0 0.0
    %964 = vmatprep.subr.mxu0 0.0
    %965 = vmatpush1.msra.mxu0 0.0
    %966 = vmatprep.subr.mxu0 0.0
    %967 = vmatpush1.msra.mxu0 0.0
    %968 = vmatprep.subr.mxu0 0.0
    %969 = vmatpush1.msra.mxu0 0.0
    %970 = vmatprep.subr.mxu0 0.0
    %971 = vmatpush1.msra.mxu0 0.0
    %972 = vmatprep.subr.mxu0 0.0
    %973 = vmatpush1.msra.mxu0 0.0
    %974 = vmatprep.subr.mxu0 0.0
    %975 = vmatpush1.msra.mxu0 0.0
    %976 = vmatprep.mubr.f32.mxu0 0.0
    %977 = vmatmul.mubr.f32.gmra.mrb[0].mxu0 %v164
    %v978 = vpop.f32.mrb[0].mxu0
    %v979 = vadd.f32 0.0, %v978
    %v980 = vpop.f32.mrb[0].mxu0
    %v981 = vadd.f32 0.0, %v980
    %982 = vmatprep.mubr.f32.mxu0 0.0
    %983 = vmatmul.mubr.f32.gmra.mrb[0].mxu0 %v167
    %v984 = vpop.f32.mrb[0].mxu0
    %v985 = vadd.f32 0.0, %v984
    %v986 = vpop.f32.mrb[0].mxu0
    %v987 = vadd.f32 0.0, %v986
    %988 = vmatprep.mubr.f32.mxu0 0.0
    %989 = vmatmul.mubr.f32.gmra.mrb[0].mxu0 %v170
    %v990 = vpop.f32.mrb[0].mxu0
    %v991 = vpop.f32.mrb[0].mxu0
    %992 = vdwg.mxu0
    %993 = vmatprep.subr.mxu0 %v899
    %994 = vmatpush1.msra.mxu0 %v898
    %995 = vmatprep.subr.mxu0 0.0
    %996 = vmatpush1.msra.mxu0 0.0
    %997 = vmatprep.subr.mxu0 0.0
    %998 = vmatpush1.msra.mxu0 0.0
    %999 = vmatprep.subr.mxu0 0.0
    %1000 = vmatpush1.msra.mxu0 0.0
    %1001 = vmatprep.subr.mxu0 0.0
    %1002 = vmatpush1.msra.mxu0 0.0
    %1003 = vmatprep.subr.mxu0 0.0
    %1004 = vmatpush1.msra.mxu0 0.0
    %1005 = vmatprep.subr.mxu0 0.0
    %1006 = vmatpush1.msra.mxu0 0.0
    %1007 = vmatprep.subr.mxu0 0.0
    %1008 = vmatpush1.msra.mxu0 0.0
    %1009 = vmatprep.subr.mxu0 0.0
    %1010 = vmatpush1.msra.mxu0 0.0
    %1011 = vmatprep.subr.mxu0 0.0
    %1012 = vmatpush1.msra.mxu0 0.0
    %1013 = vmatprep.subr.mxu0 0.0
    %1014 = vmatpush1.msra.mxu0 0.0
    %1015 = vmatprep.subr.mxu0 0.0
    %1016 = vmatpush1.msra.mxu0 0.0
    %1017 = vmatprep.subr.mxu0 0.0
    %1018 = vmatpush1.msra.mxu0 0.0
    %1019 = vmatprep.subr.mxu0 0.0
    %1020 = vmatpush1.msra.mxu0 0.0
    %1021 = vmatprep.subr.mxu0 0.0
    %1022 = vmatpush1.msra.mxu0 0.0
    %1023 = vmatprep.subr.mxu0 0.0
    %1024 = vmatpush1.msra.mxu0 0.0
    %1025 = vmatprep.subr.mxu0 0.0
    %1026 = vmatpush1.msra.mxu0 0.0
    %1027 = vmatprep.subr.mxu0 0.0
    %1028 = vmatpush1.msra.mxu0 0.0
    %1029 = vmatprep.subr.mxu0 0.0
    %1030 = vmatpush1.msra.mxu0 0.0
    %1031 = vmatprep.subr.mxu0 0.0
    %1032 = vmatpush1.msra.mxu0 0.0
    %1033 = vmatprep.subr.mxu0 0.0
    %1034 = vmatpush1.msra.mxu0 0.0
    %1035 = vmatprep.subr.mxu0 0.0
    %1036 = vmatpush1.msra.mxu0 0.0
    %1037 = vmatprep.subr.mxu0 0.0
    %1038 = vmatpush1.msra.mxu0 0.0
    %1039 = vmatprep.subr.mxu0 0.0
    %1040 = vmatpush1.msra.mxu0 0.0
    %1041 = vmatprep.subr.mxu0 0.0
    %1042 = vmatpush1.msra.mxu0 0.0
    %1043 = vmatprep.subr.mxu0 0.0
    %1044 = vmatpush1.msra.mxu0 0.0
    %1045 = vmatprep.subr.mxu0 0.0
    %1046 = vmatpush1.msra.mxu0 0.0
    %1047 = vmatprep.subr.mxu0 0.0
    %1048 = vmatpush1.msra.mxu0 0.0
    %1049 = vmatprep.subr.mxu0 0.0
    %1050 = vmatpush1.msra.mxu0 0.0
    %1051 = vmatprep.subr.mxu0 0.0
    %1052 = vmatpush1.msra.mxu0 0.0
    %1053 = vmatprep.subr.mxu0 0.0
    %1054 = vmatpush1.msra.mxu0 0.0
    %1055 = vmatprep.subr.mxu0 0.0
    %1056 = vmatpush1.msra.mxu0 0.0
    %1057 = vmatprep.mubr.f32.mxu0 0.0
    %1058 = vmatmul.mubr.f32.gmra.mrb[0].mxu0 %v164
    %v1059 = vpop.f32.mrb[0].mxu0
    %v1060 = vadd.f32 0.0, %v1059
    %v1061 = vpop.f32.mrb[0].mxu0
    %v1062 = vadd.f32 0.0, %v1061
    %1063 = vmatprep.mubr.f32.mxu0 0.0
    %1064 = vmatmul.mubr.f32.gmra.mrb[0].mxu0 %v167
    %v1065 = vpop.f32.mrb[0].mxu0
    %v1066 = vadd.f32 0.0, %v1065
    %v1067 = vpop.f32.mrb[0].mxu0
    %v1068 = vadd.f32 0.0, %v1067
    %1069 = vmatprep.mubr.f32.mxu0 0.0
    %1070 = vmatmul.mubr.f32.gmra.mrb[0].mxu0 %v170
    %v1071 = vpop.f32.mrb[0].mxu0
    %v1072 = vpop.f32.mrb[0].mxu0
    %1073 = vdwg.mxu0
    %1074 = vmatprep.subr.mxu0 %v901
    %1075 = vmatpush1.msra.mxu0 %v900
    %1076 = vmatprep.subr.mxu0 0.0
    %1077 = vmatpush1.msra.mxu0 0.0
    %1078 = vmatprep.subr.mxu0 0.0
    %1079 = vmatpush1.msra.mxu0 0.0
    %1080 = vmatprep.subr.mxu0 0.0
    %1081 = vmatpush1.msra.mxu0 0.0
    %1082 = vmatprep.subr.mxu0 0.0
    %1083 = vmatpush1.msra.mxu0 0.0
    %1084 = vmatprep.subr.mxu0 0.0
    %1085 = vmatpush1.msra.mxu0 0.0
    %1086 = vmatprep.subr.mxu0 0.0
    %1087 = vmatpush1.msra.mxu0 0.0
    %1088 = vmatprep.subr.mxu0 0.0
    %1089 = vmatpush1.msra.mxu0 0.0
    %1090 = vmatprep.subr.mxu0 0.0
    %1091 = vmatpush1.msra.mxu0 0.0
    %1092 = vmatprep.subr.mxu0 0.0
    %1093 = vmatpush1.msra.mxu0 0.0
    %1094 = vmatprep.subr.mxu0 0.0
    %1095 = vmatpush1.msra.mxu0 0.0
    %1096 = vmatprep.subr.mxu0 0.0
    %1097 = vmatpush1.msra.mxu0 0.0
    %1098 = vmatprep.subr.mxu0 0.0
    %1099 = vmatpush1.msra.mxu0 0.0
    %1100 = vmatprep.subr.mxu0 0.0
    %1101 = vmatpush1.msra.mxu0 0.0
    %1102 = vmatprep.subr.mxu0 0.0
    %1103 = vmatpush1.msra.mxu0 0.0
    %1104 = vmatprep.subr.mxu0 0.0
    %1105 = vmatpush1.msra.mxu0 0.0
    %1106 = vmatprep.subr.mxu0 0.0
    %1107 = vmatpush1.msra.mxu0 0.0
    %1108 = vmatprep.subr.mxu0 0.0
    %1109 = vmatpush1.msra.mxu0 0.0
    %1110 = vmatprep.subr.mxu0 0.0
    %1111 = vmatpush1.msra.mxu0 0.0
    %1112 = vmatprep.subr.mxu0 0.0
    %1113 = vmatpush1.msra.mxu0 0.0
    %1114 = vmatprep.subr.mxu0 0.0
    %1115 = vmatpush1.msra.mxu0 0.0
    %1116 = vmatprep.subr.mxu0 0.0
    %1117 = vmatpush1.msra.mxu0 0.0
    %1118 = vmatprep.subr.mxu0 0.0
    %1119 = vmatpush1.msra.mxu0 0.0
    %1120 = vmatprep.subr.mxu0 0.0
    %1121 = vmatpush1.msra.mxu0 0.0
    %1122 = vmatprep.subr.mxu0 0.0
    %1123 = vmatpush1.msra.mxu0 0.0
    %1124 = vmatprep.subr.mxu0 0.0
    %1125 = vmatpush1.msra.mxu0 0.0
    %1126 = vmatprep.subr.mxu0 0.0
    %1127 = vmatpush1.msra.mxu0 0.0
    %1128 = vmatprep.subr.mxu0 0.0
    %1129 = vmatpush1.msra.mxu0 0.0
    %1130 = vmatprep.subr.mxu0 0.0
    %1131 = vmatpush1.msra.mxu0 0.0
    %1132 = vmatprep.subr.mxu0 0.0
    %1133 = vmatpush1.msra.mxu0 0.0
    %1134 = vmatprep.subr.mxu0 0.0
    %1135 = vmatpush1.msra.mxu0 0.0
    %1136 = vmatprep.subr.mxu0 0.0
    %1137 = vmatpush1.msra.mxu0 0.0
    %1138 = vmatprep.mubr.f32.mxu0 0.0
    %1139 = vmatmul.mubr.f32.gmra.mrb[0].mxu0 %v164
    %v1140 = vpop.f32.mrb[0].mxu0
    %v1141 = vadd.f32 0.0, %v1140
    %v1142 = vpop.f32.mrb[0].mxu0
    %v1143 = vadd.f32 0.0, %v1142
    %1144 = vmatprep.mubr.f32.mxu0 0.0
    %1145 = vmatmul.mubr.f32.gmra.mrb[0].mxu0 %v167
    %v1146 = vpop.f32.mrb[0].mxu0
    %v1147 = vadd.f32 0.0, %v1146
    %v1148 = vpop.f32.mrb[0].mxu0
    %v1149 = vadd.f32 0.0, %v1148
    %1150 = vmatprep.mubr.f32.mxu0 0.0
    %1151 = vmatmul.mubr.f32.gmra.mrb[0].mxu0 %v170
    %v1152 = vpop.f32.mrb[0].mxu0
    %v1153 = vpop.f32.mrb[0].mxu0
    %1154 = vdwg.mxu0
    %1155 = vmatprep.subr.mxu0 %v903
    %1156 = vmatpush1.msra.mxu0 %v902
    %1157 = vmatprep.subr.mxu0 0.0
    %1158 = vmatpush1.msra.mxu0 0.0
    %1159 = vmatprep.subr.mxu0 0.0
    %1160 = vmatpush1.msra.mxu0 0.0
    %1161 = vmatprep.subr.mxu0 0.0
    %1162 = vmatpush1.msra.mxu0 0.0
    %1163 = vmatprep.subr.mxu0 0.0
    %1164 = vmatpush1.msra.mxu0 0.0
    %1165 = vmatprep.subr.mxu0 0.0
    %1166 = vmatpush1.msra.mxu0 0.0
    %1167 = vmatprep.subr.mxu0 0.0
    %1168 = vmatpush1.msra.mxu0 0.0
    %1169 = vmatprep.subr.mxu0 0.0
    %1170 = vmatpush1.msra.mxu0 0.0
    %1171 = vmatprep.subr.mxu0 0.0
    %1172 = vmatpush1.msra.mxu0 0.0
    %1173 = vmatprep.subr.mxu0 0.0
    %1174 = vmatpush1.msra.mxu0 0.0
    %1175 = vmatprep.subr.mxu0 0.0
    %1176 = vmatpush1.msra.mxu0 0.0
    %1177 = vmatprep.subr.mxu0 0.0
    %1178 = vmatpush1.msra.mxu0 0.0
    %1179 = vmatprep.subr.mxu0 0.0
    %1180 = vmatpush1.msra.mxu0 0.0
    %1181 = vmatprep.subr.mxu0 0.0
    %1182 = vmatpush1.msra.mxu0 0.0
    %1183 = vmatprep.subr.mxu0 0.0
    %1184 = vmatpush1.msra.mxu0 0.0
    %1185 = vmatprep.subr.mxu0 0.0
    %1186 = vmatpush1.msra.mxu0 0.0
    %1187 = vmatprep.subr.mxu0 0.0
    %1188 = vmatpush1.msra.mxu0 0.0
    %1189 = vmatprep.subr.mxu0 0.0
    %1190 = vmatpush1.msra.mxu0 0.0
    %1191 = vmatprep.subr.mxu0 0.0
    %1192 = vmatpush1.msra.mxu0 0.0
    %1193 = vmatprep.subr.mxu0 0.0
    %1194 = vmatpush1.msra.mxu0 0.0
    %1195 = vmatprep.subr.mxu0 0.0
    %1196 = vmatpush1.msra.mxu0 0.0
    %1197 = vmatprep.subr.mxu0 0.0
    %1198 = vmatpush1.msra.mxu0 0.0
    %1199 = vmatprep.subr.mxu0 0.0
    %1200 = vmatpush1.msra.mxu0 0.0
    %1201 = vmatprep.subr.mxu0 0.0
    %1202 = vmatpush1.msra.mxu0 0.0
    %1203 = vmatprep.subr.mxu0 0.0
    %1204 = vmatpush1.msra.mxu0 0.0
    %1205 = vmatprep.subr.mxu0 0.0
    %1206 = vmatpush1.msra.mxu0 0.0
    %1207 = vmatprep.subr.mxu0 0.0
    %1208 = vmatpush1.msra.mxu0 0.0
    %1209 = vmatprep.subr.mxu0 0.0
    %1210 = vmatpush1.msra.mxu0 0.0
    %1211 = vmatprep.subr.mxu0 0.0
    %1212 = vmatpush1.msra.mxu0 0.0
    %1213 = vmatprep.subr.mxu0 0.0
    %1214 = vmatpush1.msra.mxu0 0.0
    %1215 = vmatprep.subr.mxu0 0.0
    %1216 = vmatpush1.msra.mxu0 0.0
    %1217 = vmatprep.subr.mxu0 0.0
    %1218 = vmatpush1.msra.mxu0 0.0
    %1219 = vmatprep.mubr.f32.mxu0 0.0
    %1220 = vmatmul.mubr.f32.gmra.mrb[0].mxu0 %v164
    %v1221 = vpop.f32.mrb[0].mxu0
    %v1222 = vadd.f32 0.0, %v1221
    %v1223 = vpop.f32.mrb[0].mxu0
    %v1224 = vadd.f32 0.0, %v1223
    %1225 = vmatprep.mubr.f32.mxu0 0.0
    %1226 = vmatmul.mubr.f32.gmra.mrb[0].mxu0 %v167
    %v1227 = vpop.f32.mrb[0].mxu0
    %v1228 = vadd.f32 0.0, %v1227
    %v1229 = vpop.f32.mrb[0].mxu0
    %v1230 = vadd.f32 0.0, %v1229
    %1231 = vmatprep.mubr.f32.mxu0 0.0
    %1232 = vmatmul.mubr.f32.gmra.mrb[0].mxu0 %v170
    %v1233 = vpop.f32.mrb[0].mxu0
    %v1234 = vpop.f32.mrb[0].mxu0
    %1235 = vdwg.mxu0
    %1236 = vmatprep.subr.mxu0 %v905
    %1237 = vmatpush1.msra.mxu0 %v904
    %1238 = vmatprep.subr.mxu0 0.0
    %1239 = vmatpush1.msra.mxu0 0.0
    %1240 = vmatprep.subr.mxu0 0.0
    %1241 = vmatpush1.msra.mxu0 0.0
    %1242 = vmatprep.subr.mxu0 0.0
    %1243 = vmatpush1.msra.mxu0 0.0
    %1244 = vmatprep.subr.mxu0 0.0
    %1245 = vmatpush1.msra.mxu0 0.0
    %1246 = vmatprep.subr.mxu0 0.0
    %1247 = vmatpush1.msra.mxu0 0.0
    %1248 = vmatprep.subr.mxu0 0.0
    %1249 = vmatpush1.msra.mxu0 0.0
    %1250 = vmatprep.subr.mxu0 0.0
    %1251 = vmatpush1.msra.mxu0 0.0
    %1252 = vmatprep.subr.mxu0 0.0
    %1253 = vmatpush1.msra.mxu0 0.0
    %1254 = vmatprep.subr.mxu0 0.0
    %1255 = vmatpush1.msra.mxu0 0.0
    %1256 = vmatprep.subr.mxu0 0.0
    %1257 = vmatpush1.msra.mxu0 0.0
    %1258 = vmatprep.subr.mxu0 0.0
    %1259 = vmatpush1.msra.mxu0 0.0
    %1260 = vmatprep.subr.mxu0 0.0
    %1261 = vmatpush1.msra.mxu0 0.0
    %1262 = vmatprep.subr.mxu0 0.0
    %1263 = vmatpush1.msra.mxu0 0.0
    %1264 = vmatprep.subr.mxu0 0.0
    %1265 = vmatpush1.msra.mxu0 0.0
    %1266 = vmatprep.subr.mxu0 0.0
    %1267 = vmatpush1.msra.mxu0 0.0
    %1268 = vmatprep.subr.mxu0 0.0
    %1269 = vmatpush1.msra.mxu0 0.0
    %1270 = vmatprep.subr.mxu0 0.0
    %1271 = vmatpush1.msra.mxu0 0.0
    %1272 = vmatprep.subr.mxu0 0.0
    %1273 = vmatpush1.msra.mxu0 0.0
    %1274 = vmatprep.subr.mxu0 0.0
    %1275 = vmatpush1.msra.mxu0 0.0
    %1276 = vmatprep.subr.mxu0 0.0
    %1277 = vmatpush1.msra.mxu0 0.0
    %1278 = vmatprep.subr.mxu0 0.0
    %1279 = vmatpush1.msra.mxu0 0.0
    %1280 = vmatprep.subr.mxu0 0.0
    %1281 = vmatpush1.msra.mxu0 0.0
    %1282 = vmatprep.subr.mxu0 0.0
    %1283 = vmatpush1.msra.mxu0 0.0
    %1284 = vmatprep.subr.mxu0 0.0
    %1285 = vmatpush1.msra.mxu0 0.0
    %1286 = vmatprep.subr.mxu0 0.0
    %1287 = vmatpush1.msra.mxu0 0.0
    %1288 = vmatprep.subr.mxu0 0.0
    %1289 = vmatpush1.msra.mxu0 0.0
    %1290 = vmatprep.subr.mxu0 0.0
    %1291 = vmatpush1.msra.mxu0 0.0
    %1292 = vmatprep.subr.mxu0 0.0
    %1293 = vmatpush1.msra.mxu0 0.0
    %1294 = vmatprep.subr.mxu0 0.0
    %1295 = vmatpush1.msra.mxu0 0.0
    %1296 = vmatprep.subr.mxu0 0.0
    %1297 = vmatpush1.msra.mxu0 0.0
    %1298 = vmatprep.subr.mxu0 0.0
    %1299 = vmatpush1.msra.mxu0 0.0
    %1300 = vmatprep.mubr.f32.mxu0 0.0
    %1301 = vmatmul.mubr.f32.gmra.mrb[0].mxu0 %v164
    %v1302 = vpop.f32.mrb[0].mxu0
    %v1303 = vadd.f32 0.0, %v1302
    %v1304 = vpop.f32.mrb[0].mxu0
    %v1305 = vadd.f32 0.0, %v1304
    %1306 = vmatprep.mubr.f32.mxu0 0.0
    %1307 = vmatmul.mubr.f32.gmra.mrb[0].mxu0 %v167
    %v1308 = vpop.f32.mrb[0].mxu0
    %v1309 = vadd.f32 0.0, %v1308
    %v1310 = vpop.f32.mrb[0].mxu0
    %v1311 = vadd.f32 0.0, %v1310
    %1312 = vmatprep.mubr.f32.mxu0 0.0
    %1313 = vmatmul.mubr.f32.gmra.mrb[0].mxu0 %v170
    %v1314 = vpop.f32.mrb[0].mxu0
    %v1315 = vpop.f32.mrb[0].mxu0
    %1316 = vdwg.mxu0
    %1317 = vmatprep.subr.mxu0 %v907
    %1318 = vmatpush1.msra.mxu0 %v906
    %1319 = vmatprep.subr.mxu0 0.0
    %1320 = vmatpush1.msra.mxu0 0.0
    %1321 = vmatprep.subr.mxu0 0.0
    %1322 = vmatpush1.msra.mxu0 0.0
    %1323 = vmatprep.subr.mxu0 0.0
    %1324 = vmatpush1.msra.mxu0 0.0
    %1325 = vmatprep.subr.mxu0 0.0
    %1326 = vmatpush1.msra.mxu0 0.0
    %1327 = vmatprep.subr.mxu0 0.0
    %1328 = vmatpush1.msra.mxu0 0.0
    %1329 = vmatprep.subr.mxu0 0.0
    %1330 = vmatpush1.msra.mxu0 0.0
    %1331 = vmatprep.subr.mxu0 0.0
    %1332 = vmatpush1.msra.mxu0 0.0
    %1333 = vmatprep.subr.mxu0 0.0
    %1334 = vmatpush1.msra.mxu0 0.0
    %1335 = vmatprep.subr.mxu0 0.0
    %1336 = vmatpush1.msra.mxu0 0.0
    %1337 = vmatprep.subr.mxu0 0.0
    %1338 = vmatpush1.msra.mxu0 0.0
    %1339 = vmatprep.subr.mxu0 0.0
    %1340 = vmatpush1.msra.mxu0 0.0
    %1341 = vmatprep.subr.mxu0 0.0
    %1342 = vmatpush1.msra.mxu0 0.0
    %1343 = vmatprep.subr.mxu0 0.0
    %1344 = vmatpush1.msra.mxu0 0.0
    %1345 = vmatprep.subr.mxu0 0.0
    %1346 = vmatpush1.msra.mxu0 0.0
    %1347 = vmatprep.subr.mxu0 0.0
    %1348 = vmatpush1.msra.mxu0 0.0
    %1349 = vmatprep.subr.mxu0 0.0
    %1350 = vmatpush1.msra.mxu0 0.0
    %1351 = vmatprep.subr.mxu0 0.0
    %1352 = vmatpush1.msra.mxu0 0.0
    %1353 = vmatprep.subr.mxu0 0.0
    %1354 = vmatpush1.msra.mxu0 0.0
    %1355 = vmatprep.subr.mxu0 0.0
    %1356 = vmatpush1.msra.mxu0 0.0
    %1357 = vmatprep.subr.mxu0 0.0
    %1358 = vmatpush1.msra.mxu0 0.0
    %1359 = vmatprep.subr.mxu0 0.0
    %1360 = vmatpush1.msra.mxu0 0.0
    %1361 = vmatprep.subr.mxu0 0.0
    %1362 = vmatpush1.msra.mxu0 0.0
    %1363 = vmatprep.subr.mxu0 0.0
    %1364 = vmatpush1.msra.mxu0 0.0
    %1365 = vmatprep.subr.mxu0 0.0
    %1366 = vmatpush1.msra.mxu0 0.0
    %1367 = vmatprep.subr.mxu0 0.0
    %1368 = vmatpush1.msra.mxu0 0.0
    %1369 = vmatprep.subr.mxu0 0.0
    %1370 = vmatpush1.msra.mxu0 0.0
    %1371 = vmatprep.subr.mxu0 0.0
    %1372 = vmatpush1.msra.mxu0 0.0
    %1373 = vmatprep.subr.mxu0 0.0
    %1374 = vmatpush1.msra.mxu0 0.0
    %1375 = vmatprep.subr.mxu0 0.0
    %1376 = vmatpush1.msra.mxu0 0.0
    %1377 = vmatprep.subr.mxu0 0.0
    %1378 = vmatpush1.msra.mxu0 0.0
    %1379 = vmatprep.subr.mxu0 0.0
    %1380 = vmatpush1.msra.mxu0 0.0
    %1381 = vmatprep.mubr.f32.mxu0 0.0
    %1382 = vmatmul.mubr.f32.gmra.mrb[0].mxu0 %v164
    %v1383 = vpop.f32.mrb[0].mxu0
    %v1384 = vadd.f32 0.0, %v1383
    %v1385 = vpop.f32.mrb[0].mxu0
    %v1386 = vadd.f32 0.0, %v1385
    %1387 = vmatprep.mubr.f32.mxu0 0.0
    %1388 = vmatmul.mubr.f32.gmra.mrb[0].mxu0 %v167
    %v1389 = vpop.f32.mrb[0].mxu0
    %v1390 = vadd.f32 0.0, %v1389
    %v1391 = vpop.f32.mrb[0].mxu0
    %v1392 = vadd.f32 0.0, %v1391
    %1393 = vmatprep.mubr.f32.mxu0 0.0
    %1394 = vmatmul.mubr.f32.gmra.mrb[0].mxu0 %v170
    %v1395 = vpop.f32.mrb[0].mxu0
    %v1396 = vpop.f32.mrb[0].mxu0
    %1397 = vdwg.mxu0
    %1398 = vmatprep.subr.mxu0 %v909
    %1399 = vmatpush1.msra.mxu0 %v908
    %1400 = vmatprep.subr.mxu0 0.0
    %1401 = vmatpush1.msra.mxu0 0.0
    %1402 = vmatprep.subr.mxu0 0.0
    %1403 = vmatpush1.msra.mxu0 0.0
    %1404 = vmatprep.subr.mxu0 0.0
    %1405 = vmatpush1.msra.mxu0 0.0
    %1406 = vmatprep.subr.mxu0 0.0
    %1407 = vmatpush1.msra.mxu0 0.0
    %1408 = vmatprep.subr.mxu0 0.0
    %1409 = vmatpush1.msra.mxu0 0.0
    %1410 = vmatprep.subr.mxu0 0.0
    %1411 = vmatpush1.msra.mxu0 0.0
    %1412 = vmatprep.subr.mxu0 0.0
    %1413 = vmatpush1.msra.mxu0 0.0
    %1414 = vmatprep.subr.mxu0 0.0
    %1415 = vmatpush1.msra.mxu0 0.0
    %1416 = vmatprep.subr.mxu0 0.0
    %1417 = vmatpush1.msra.mxu0 0.0
    %1418 = vmatprep.subr.mxu0 0.0
    %1419 = vmatpush1.msra.mxu0 0.0
    %1420 = vmatprep.subr.mxu0 0.0
    %1421 = vmatpush1.msra.mxu0 0.0
    %1422 = vmatprep.subr.mxu0 0.0
    %1423 = vmatpush1.msra.mxu0 0.0
    %1424 = vmatprep.subr.mxu0 0.0
    %1425 = vmatpush1.msra.mxu0 0.0
    %1426 = vmatprep.subr.mxu0 0.0
    %1427 = vmatpush1.msra.mxu0 0.0
    %1428 = vmatprep.subr.mxu0 0.0
    %1429 = vmatpush1.msra.mxu0 0.0
    %1430 = vmatprep.subr.mxu0 0.0
    %1431 = vmatpush1.msra.mxu0 0.0
    %1432 = vmatprep.subr.mxu0 0.0
    %1433 = vmatpush1.msra.mxu0 0.0
    %1434 = vmatprep.subr.mxu0 0.0
    %1435 = vmatpush1.msra.mxu0 0.0
    %1436 = vmatprep.subr.mxu0 0.0
    %1437 = vmatpush1.msra.mxu0 0.0
    %1438 = vmatprep.subr.mxu0 0.0
    %1439 = vmatpush1.msra.mxu0 0.0
    %1440 = vmatprep.subr.mxu0 0.0
    %1441 = vmatpush1.msra.mxu0 0.0
    %1442 = vmatprep.subr.mxu0 0.0
    %1443 = vmatpush1.msra.mxu0 0.0
    %1444 = vmatprep.subr.mxu0 0.0
    %1445 = vmatpush1.msra.mxu0 0.0
    %1446 = vmatprep.subr.mxu0 0.0
    %1447 = vmatpush1.msra.mxu0 0.0
    %1448 = vmatprep.subr.mxu0 0.0
    %1449 = vmatpush1.msra.mxu0 0.0
    %1450 = vmatprep.subr.mxu0 0.0
    %1451 = vmatpush1.msra.mxu0 0.0
    %1452 = vmatprep.subr.mxu0 0.0
    %1453 = vmatpush1.msra.mxu0 0.0
    %1454 = vmatprep.subr.mxu0 0.0
    %1455 = vmatpush1.msra.mxu0 0.0
    %1456 = vmatprep.subr.mxu0 0.0
    %1457 = vmatpush1.msra.mxu0 0.0
    %1458 = vmatprep.subr.mxu0 0.0
    %1459 = vmatpush1.msra.mxu0 0.0
    %1460 = vmatprep.subr.mxu0 0.0
    %1461 = vmatpush1.msra.mxu0 0.0
    %1462 = vmatprep.mubr.f32.mxu0 0.0
    %1463 = vmatmul.mubr.f32.gmra.mrb[0].mxu0 %v164
    %v1464 = vpop.f32.mrb[0].mxu0
    %v1465 = vadd.f32 0.0, %v1464
    %v1466 = vpop.f32.mrb[0].mxu0
    %v1467 = vadd.f32 0.0, %v1466
    %1468 = vmatprep.mubr.f32.mxu0 0.0
    %1469 = vmatmul.mubr.f32.gmra.mrb[0].mxu0 %v167
    %v1470 = vpop.f32.mrb[0].mxu0
    %v1471 = vadd.f32 0.0, %v1470
    %v1472 = vpop.f32.mrb[0].mxu0
    %v1473 = vadd.f32 0.0, %v1472
    %1474 = vmatprep.mubr.f32.mxu0 0.0
    %1475 = vmatmul.mubr.f32.gmra.mrb[0].mxu0 %v170
    %v1476 = vpop.f32.mrb[0].mxu0
    %v1477 = vpop.f32.mrb[0].mxu0
    %1478 = vdwg.mxu0
    %1479 = vmatprep.subr.mxu0 %v911
    %1480 = vmatpush1.msra.mxu0 %v910
    %1481 = vmatprep.subr.mxu0 0.0
    %1482 = vmatpush1.msra.mxu0 0.0
    %1483 = vmatprep.subr.mxu0 0.0
    %1484 = vmatpush1.msra.mxu0 0.0
    %1485 = vmatprep.subr.mxu0 0.0
    %1486 = vmatpush1.msra.mxu0 0.0
    %1487 = vmatprep.subr.mxu0 0.0
    %1488 = vmatpush1.msra.mxu0 0.0
    %1489 = vmatprep.subr.mxu0 0.0
    %1490 = vmatpush1.msra.mxu0 0.0
    %1491 = vmatprep.subr.mxu0 0.0
    %1492 = vmatpush1.msra.mxu0 0.0
    %1493 = vmatprep.subr.mxu0 0.0
    %1494 = vmatpush1.msra.mxu0 0.0
    %1495 = vmatprep.subr.mxu0 0.0
    %1496 = vmatpush1.msra.mxu0 0.0
    %1497 = vmatprep.subr.mxu0 0.0
    %1498 = vmatpush1.msra.mxu0 0.0
    %1499 = vmatprep.subr.mxu0 0.0
    %1500 = vmatpush1.msra.mxu0 0.0
    %1501 = vmatprep.subr.mxu0 0.0
    %1502 = vmatpush1.msra.mxu0 0.0
    %1503 = vmatprep.subr.mxu0 0.0
    %1504 = vmatpush1.msra.mxu0 0.0
    %1505 = vmatprep.subr.mxu0 0.0
    %1506 = vmatpush1.msra.mxu0 0.0
    %1507 = vmatprep.subr.mxu0 0.0
    %1508 = vmatpush1.msra.mxu0 0.0
    %1509 = vmatprep.subr.mxu0 0.0
    %1510 = vmatpush1.msra.mxu0 0.0
    %1511 = vmatprep.subr.mxu0 0.0
    %1512 = vmatpush1.msra.mxu0 0.0
    %1513 = vmatprep.subr.mxu0 0.0
    %1514 = vmatpush1.msra.mxu0 0.0
    %1515 = vmatprep.subr.mxu0 0.0
    %1516 = vmatpush1.msra.mxu0 0.0
    %1517 = vmatprep.subr.mxu0 0.0
    %1518 = vmatpush1.msra.mxu0 0.0
    %1519 = vmatprep.subr.mxu0 0.0
    %1520 = vmatpush1.msra.mxu0 0.0
    %1521 = vmatprep.subr.mxu0 0.0
    %1522 = vmatpush1.msra.mxu0 0.0
    %1523 = vmatprep.subr.mxu0 0.0
    %1524 = vmatpush1.msra.mxu0 0.0
    %1525 = vmatprep.subr.mxu0 0.0
    %1526 = vmatpush1.msra.mxu0 0.0
    %1527 = vmatprep.subr.mxu0 0.0
    %1528 = vmatpush1.msra.mxu0 0.0
    %1529 = vmatprep.subr.mxu0 0.0
    %1530 = vmatpush1.msra.mxu0 0.0
    %1531 = vmatprep.subr.mxu0 0.0
    %1532 = vmatpush1.msra.mxu0 0.0
    %1533 = vmatprep.subr.mxu0 0.0
    %1534 = vmatpush1.msra.mxu0 0.0
    %1535 = vmatprep.subr.mxu0 0.0
    %1536 = vmatpush1.msra.mxu0 0.0
    %1537 = vmatprep.subr.mxu0 0.0
    %1538 = vmatpush1.msra.mxu0 0.0
    %1539 = vmatprep.subr.mxu0 0.0
    %1540 = vmatpush1.msra.mxu0 0.0
    %1541 = vmatprep.subr.mxu0 0.0
    %1542 = vmatpush1.msra.mxu0 0.0
    %1543 = vmatprep.mubr.f32.mxu0 0.0
    %1544 = vmatmul.mubr.f32.gmra.mrb[0].mxu0 %v164
    %v1545 = vpop.f32.mrb[0].mxu0
    %v1546 = vadd.f32 0.0, %v1545
    %v1547 = vpop.f32.mrb[0].mxu0
    %v1548 = vadd.f32 0.0, %v1547
    %1549 = vmatprep.mubr.f32.mxu0 0.0
    %1550 = vmatmul.mubr.f32.gmra.mrb[0].mxu0 %v167
    %v1551 = vpop.f32.mrb[0].mxu0
    %v1552 = vadd.f32 0.0, %v1551
    %v1553 = vpop.f32.mrb[0].mxu0
    %v1554 = vadd.f32 0.0, %v1553
    %1555 = vmatprep.mubr.f32.mxu0 0.0
    %1556 = vmatmul.mubr.f32.gmra.mrb[0].mxu0 %v170
    %v1557 = vpop.f32.mrb[0].mxu0
    %v1558 = vpop.f32.mrb[0].mxu0
    %1559 = vdwg.mxu0
    %v1560 = vmul.f32 %v979, %v64
    %v1561 = vmul.f32 %v981, %v68
    %v1562 = vmul.f32 %v1060, %v72
    %v1563 = vmul.f32 %v1062, %v76
    %v1564 = vmul.f32 %v1141, %v80
    %v1565 = vmul.f32 %v1143, %v84
    %v1566 = vmul.f32 %v1222, %v88
    %v1567 = vmul.f32 %v1224, %v92
    %v1568 = vmul.f32 %v1303, %v96
    %v1569 = vmul.f32 %v1305, %v100
    %v1570 = vmul.f32 %v1384, %v104
    %v1571 = vmul.f32 %v1386, %v108
    %v1572 = vmul.f32 %v1465, %v112
    %v1573 = vmul.f32 %v1467, %v116
    %v1574 = vmul.f32 %v1546, %v120
    %v1575 = vmul.f32 %v1548, %v124
    %v1576 = vadd.f32 %v1560, %v1562
    %v1577 = vadd.f32 %v1561, %v1563
    %v1578 = vadd.f32 %v1576, %v1564
    %v1579 = vadd.f32 %v1577, %v1565
    %v1580 = vadd.f32 %v1578, %v1566
    %v1581 = vadd.f32 %v1579, %v1567
    %v1582 = vadd.f32 %v1568, %v1570
    %v1583 = vadd.f32 %v1569, %v1571
    %v1584 = vadd.f32 %v1582, %v1572
    %v1585 = vadd.f32 %v1583, %v1573
    %v1586 = vadd.f32 %v1584, %v1574
    %v1587 = vadd.f32 %v1585, %v1575
    %v1588 = vadd.f32 %v985, %v144
    %v1589 = vadd.f32 %v987, %v144
    %v1590 = vadd.f32 %v1066, %v144
    %v1591 = vadd.f32 %v1068, %v144
    %v1592 = vadd.f32 %v1147, %v144
    %v1593 = vadd.f32 %v1149, %v144
    %v1594 = vadd.f32 %v1228, %v144
    %v1595 = vadd.f32 %v1230, %v144
    %v1596 = vadd.f32 %v1309, %v144
    %v1597 = vadd.f32 %v1311, %v144
    %v1598 = vadd.f32 %v1390, %v144
    %v1599 = vadd.f32 %v1392, %v144
    %v1600 = vadd.f32 %v1471, %v144
    %v1601 = vadd.f32 %v1473, %v144
    %v1602 = vadd.f32 %v1552, %v144
    %v1603 = vadd.f32 %v1554, %v144
    %v1604 = vsub.f32 %v1580, %v1560
    %v1605 = vsub.f32 %v1581, %v1561
    %v1606 = vsub.f32 %v1580, %v1562
    %v1607 = vsub.f32 %v1581, %v1563
    %v1608 = vsub.f32 %v1580, %v1564
    %v1609 = vsub.f32 %v1581, %v1565
    %v1610 = vsub.f32 %v1580, %v1566
    %v1611 = vsub.f32 %v1581, %v1567
    %v1612 = vsub.f32 %v1586, %v1568
    %v1613 = vsub.f32 %v1587, %v1569
    %v1614 = vsub.f32 %v1586, %v1570
    %v1615 = vsub.f32 %v1587, %v1571
    %v1616 = vsub.f32 %v1586, %v1572
    %v1617 = vsub.f32 %v1587, %v1573
    %v1618 = vsub.f32 %v1586, %v1574
    %v1619 = vsub.f32 %v1587, %v1575
    %v1620 = vadd.f32 %v1588, %v1604
    %v1621 = vadd.f32 %v1589, %v1605
    %v1622 = vadd.f32 %v1590, %v1606
    %v1623 = vadd.f32 %v1591, %v1607
    %v1624 = vadd.f32 %v1592, %v1608
    %v1625 = vadd.f32 %v1593, %v1609
    %v1626 = vadd.f32 %v1594, %v1610
    %v1627 = vadd.f32 %v1595, %v1611
    %v1628 = vadd.f32 %v1596, %v1612
    %v1629 = vadd.f32 %v1597, %v1613
    %v1630 = vadd.f32 %v1598, %v1614
    %v1631 = vadd.f32 %v1599, %v1615
    %v1632 = vadd.f32 %v1600, %v1616
    %v1633 = vadd.f32 %v1601, %v1617
    %v1634 = vadd.f32 %v1602, %v1618
    %v1635 = vadd.f32 %v1603, %v1619
    %v1636 = vmax.f32 %v1620, 0.0
    %v1637 = vmax.f32 %v1621, 0.0
    %v1638 = vmax.f32 %v1622, 0.0
    %v1639 = vmax.f32 %v1623, 0.0
    %v1640 = vmax.f32 %v1624, 0.0
    %v1641 = vmax.f32 %v1625, 0.0
    %v1642 = vmax.f32 %v1626, 0.0
    %v1643 = vmax.f32 %v1627, 0.0
    %v1644 = vmax.f32 %v1628, 0.0
    %v1645 = vmax.f32 %v1629, 0.0
    %v1646 = vmax.f32 %v1630, 0.0
    %v1647 = vmax.f32 %v1631, 0.0
    %v1648 = vmax.f32 %v1632, 0.0
    %v1649 = vmax.f32 %v1633, 0.0
    %v1650 = vmax.f32 %v1634, 0.0
    %v1651 = vmax.f32 %v1635, 0.0
    %1652 = vmatprep.subr.mxu0 %v1637
    %1653 = vmatpush1.msra.mxu0 %v1636
    %1654 = vmatprep.subr.mxu0 0.0
    %1655 = vmatpush1.msra.mxu0 0.0
    %1656 = vmatprep.subr.mxu0 0.0
    %1657 = vmatpush1.msra.mxu0 0.0
    %1658 = vmatprep.subr.mxu0 0.0
    %1659 = vmatpush1.msra.mxu0 0.0
    %1660 = vmatprep.subr.mxu0 0.0
    %1661 = vmatpush1.msra.mxu0 0.0
    %1662 = vmatprep.subr.mxu0 0.0
    %1663 = vmatpush1.msra.mxu0 0.0
    %1664 = vmatprep.subr.mxu0 0.0
    %1665 = vmatpush1.msra.mxu0 0.0
    %1666 = vmatprep.subr.mxu0 0.0
    %1667 = vmatpush1.msra.mxu0 0.0
    %1668 = vmatprep.subr.mxu0 0.0
    %1669 = vmatpush1.msra.mxu0 0.0
    %1670 = vmatprep.subr.mxu0 0.0
    %1671 = vmatpush1.msra.mxu0 0.0
    %1672 = vmatprep.subr.mxu0 0.0
    %1673 = vmatpush1.msra.mxu0 0.0
    %1674 = vmatprep.subr.mxu0 0.0
    %1675 = vmatpush1.msra.mxu0 0.0
    %1676 = vmatprep.subr.mxu0 0.0
    %1677 = vmatpush1.msra.mxu0 0.0
    %1678 = vmatprep.subr.mxu0 0.0
    %1679 = vmatpush1.msra.mxu0 0.0
    %1680 = vmatprep.subr.mxu0 0.0
    %1681 = vmatpush1.msra.mxu0 0.0
    %1682 = vmatprep.subr.mxu0 0.0
    %1683 = vmatpush1.msra.mxu0 0.0
    %1684 = vmatprep.subr.mxu0 0.0
    %1685 = vmatpush1.msra.mxu0 0.0
    %1686 = vmatprep.subr.mxu0 0.0
    %1687 = vmatpush1.msra.mxu0 0.0
    %1688 = vmatprep.subr.mxu0 0.0
    %1689 = vmatpush1.msra.mxu0 0.0
    %1690 = vmatprep.subr.mxu0 0.0
    %1691 = vmatpush1.msra.mxu0 0.0
    %1692 = vmatprep.subr.mxu0 0.0
    %1693 = vmatpush1.msra.mxu0 0.0
    %1694 = vmatprep.subr.mxu0 0.0
    %1695 = vmatpush1.msra.mxu0 0.0
    %1696 = vmatprep.subr.mxu0 0.0
    %1697 = vmatpush1.msra.mxu0 0.0
    %1698 = vmatprep.subr.mxu0 0.0
    %1699 = vmatpush1.msra.mxu0 0.0
    %1700 = vmatprep.subr.mxu0 0.0
    %1701 = vmatpush1.msra.mxu0 0.0
    %1702 = vmatprep.subr.mxu0 0.0
    %1703 = vmatpush1.msra.mxu0 0.0
    %1704 = vmatprep.subr.mxu0 0.0
    %1705 = vmatpush1.msra.mxu0 0.0
    %1706 = vmatprep.subr.mxu0 0.0
    %1707 = vmatpush1.msra.mxu0 0.0
    %1708 = vmatprep.subr.mxu0 0.0
    %1709 = vmatpush1.msra.mxu0 0.0
    %1710 = vmatprep.subr.mxu0 0.0
    %1711 = vmatpush1.msra.mxu0 0.0
    %1712 = vmatprep.subr.mxu0 0.0
    %1713 = vmatpush1.msra.mxu0 0.0
    %1714 = vmatprep.subr.mxu0 0.0
    %1715 = vmatpush1.msra.mxu0 0.0
    %1716 = vmatprep.mubr.f32.mxu0 0.0
    %1717 = vmatmul.mubr.f32.gmra.mrb[0].mxu0 %v164
    %v1718 = vpop.f32.mrb[0].mxu0
    %v1719 = vpop.f32.mrb[0].mxu0
    %1720 = vmatprep.mubr.f32.mxu0 0.0
    %1721 = vmatmul.mubr.f32.gmra.mrb[0].mxu0 %v167
    %v1722 = vpop.f32.mrb[0].mxu0
    %v1723 = vpop.f32.mrb[0].mxu0
    %1724 = vmatprep.mubr.f32.mxu0 0.0
    %1725 = vmatmul.mubr.f32.gmra.mrb[0].mxu0 %v170
    %v1726 = vpop.f32.mrb[0].mxu0
    %v1727 = vadd.f32 0.0, %v1726
    %v1728 = vpop.f32.mrb[0].mxu0
    %v1729 = vadd.f32 0.0, %v1728
    %1730 = vdwg.mxu0
    %1731 = vmatprep.subr.mxu0 %v1639
    %1732 = vmatpush1.msra.mxu0 %v1638
    %1733 = vmatprep.subr.mxu0 0.0
    %1734 = vmatpush1.msra.mxu0 0.0
    %1735 = vmatprep.subr.mxu0 0.0
    %1736 = vmatpush1.msra.mxu0 0.0
    %1737 = vmatprep.subr.mxu0 0.0
    %1738 = vmatpush1.msra.mxu0 0.0
    %1739 = vmatprep.subr.mxu0 0.0
    %1740 = vmatpush1.msra.mxu0 0.0
    %1741 = vmatprep.subr.mxu0 0.0
    %1742 = vmatpush1.msra.mxu0 0.0
    %1743 = vmatprep.subr.mxu0 0.0
    %1744 = vmatpush1.msra.mxu0 0.0
    %1745 = vmatprep.subr.mxu0 0.0
    %1746 = vmatpush1.msra.mxu0 0.0
    %1747 = vmatprep.subr.mxu0 0.0
    %1748 = vmatpush1.msra.mxu0 0.0
    %1749 = vmatprep.subr.mxu0 0.0
    %1750 = vmatpush1.msra.mxu0 0.0
    %1751 = vmatprep.subr.mxu0 0.0
    %1752 = vmatpush1.msra.mxu0 0.0
    %1753 = vmatprep.subr.mxu0 0.0
    %1754 = vmatpush1.msra.mxu0 0.0
    %1755 = vmatprep.subr.mxu0 0.0
    %1756 = vmatpush1.msra.mxu0 0.0
    %1757 = vmatprep.subr.mxu0 0.0
    %1758 = vmatpush1.msra.mxu0 0.0
    %1759 = vmatprep.subr.mxu0 0.0
    %1760 = vmatpush1.msra.mxu0 0.0
    %1761 = vmatprep.subr.mxu0 0.0
    %1762 = vmatpush1.msra.mxu0 0.0
    %1763 = vmatprep.subr.mxu0 0.0
    %1764 = vmatpush1.msra.mxu0 0.0
    %1765 = vmatprep.subr.mxu0 0.0
    %1766 = vmatpush1.msra.mxu0 0.0
    %1767 = vmatprep.subr.mxu0 0.0
    %1768 = vmatpush1.msra.mxu0 0.0
    %1769 = vmatprep.subr.mxu0 0.0
    %1770 = vmatpush1.msra.mxu0 0.0
    %1771 = vmatprep.subr.mxu0 0.0
    %1772 = vmatpush1.msra.mxu0 0.0
    %1773 = vmatprep.subr.mxu0 0.0
    %1774 = vmatpush1.msra.mxu0 0.0
    %1775 = vmatprep.subr.mxu0 0.0
    %1776 = vmatpush1.msra.mxu0 0.0
    %1777 = vmatprep.subr.mxu0 0.0
    %1778 = vmatpush1.msra.mxu0 0.0
    %1779 = vmatprep.subr.mxu0 0.0
    %1780 = vmatpush1.msra.mxu0 0.0
    %1781 = vmatprep.subr.mxu0 0.0
    %1782 = vmatpush1.msra.mxu0 0.0
    %1783 = vmatprep.subr.mxu0 0.0
    %1784 = vmatpush1.msra.mxu0 0.0
    %1785 = vmatprep.subr.mxu0 0.0
    %1786 = vmatpush1.msra.mxu0 0.0
    %1787 = vmatprep.subr.mxu0 0.0
    %1788 = vmatpush1.msra.mxu0 0.0
    %1789 = vmatprep.subr.mxu0 0.0
    %1790 = vmatpush1.msra.mxu0 0.0
    %1791 = vmatprep.subr.mxu0 0.0
    %1792 = vmatpush1.msra.mxu0 0.0
    %1793 = vmatprep.subr.mxu0 0.0
    %1794 = vmatpush1.msra.mxu0 0.0
    %1795 = vmatprep.mubr.f32.mxu0 0.0
    %1796 = vmatmul.mubr.f32.gmra.mrb[0].mxu0 %v164
    %v1797 = vpop.f32.mrb[0].mxu0
    %v1798 = vpop.f32.mrb[0].mxu0
    %1799 = vmatprep.mubr.f32.mxu0 0.0
    %1800 = vmatmul.mubr.f32.gmra.mrb[0].mxu0 %v167
    %v1801 = vpop.f32.mrb[0].mxu0
    %v1802 = vpop.f32.mrb[0].mxu0
    %1803 = vmatprep.mubr.f32.mxu0 0.0
    %1804 = vmatmul.mubr.f32.gmra.mrb[0].mxu0 %v170
    %v1805 = vpop.f32.mrb[0].mxu0
    %v1806 = vadd.f32 0.0, %v1805
    %v1807 = vpop.f32.mrb[0].mxu0
    %v1808 = vadd.f32 0.0, %v1807
    %1809 = vdwg.mxu0
    %1810 = vmatprep.subr.mxu0 %v1641
    %1811 = vmatpush1.msra.mxu0 %v1640
    %1812 = vmatprep.subr.mxu0 0.0
    %1813 = vmatpush1.msra.mxu0 0.0
    %1814 = vmatprep.subr.mxu0 0.0
    %1815 = vmatpush1.msra.mxu0 0.0
    %1816 = vmatprep.subr.mxu0 0.0
    %1817 = vmatpush1.msra.mxu0 0.0
    %1818 = vmatprep.subr.mxu0 0.0
    %1819 = vmatpush1.msra.mxu0 0.0
    %1820 = vmatprep.subr.mxu0 0.0
    %1821 = vmatpush1.msra.mxu0 0.0
    %1822 = vmatprep.subr.mxu0 0.0
    %1823 = vmatpush1.msra.mxu0 0.0
    %1824 = vmatprep.subr.mxu0 0.0
    %1825 = vmatpush1.msra.mxu0 0.0
    %1826 = vmatprep.subr.mxu0 0.0
    %1827 = vmatpush1.msra.mxu0 0.0
    %1828 = vmatprep.subr.mxu0 0.0
    %1829 = vmatpush1.msra.mxu0 0.0
    %1830 = vmatprep.subr.mxu0 0.0
    %1831 = vmatpush1.msra.mxu0 0.0
    %1832 = vmatprep.subr.mxu0 0.0
    %1833 = vmatpush1.msra.mxu0 0.0
    %1834 = vmatprep.subr.mxu0 0.0
    %1835 = vmatpush1.msra.mxu0 0.0
    %1836 = vmatprep.subr.mxu0 0.0
    %1837 = vmatpush1.msra.mxu0 0.0
    %1838 = vmatprep.subr.mxu0 0.0
    %1839 = vmatpush1.msra.mxu0 0.0
    %1840 = vmatprep.subr.mxu0 0.0
    %1841 = vmatpush1.msra.mxu0 0.0
    %1842 = vmatprep.subr.mxu0 0.0
    %1843 = vmatpush1.msra.mxu0 0.0
    %1844 = vmatprep.subr.mxu0 0.0
    %1845 = vmatpush1.msra.mxu0 0.0
    %1846 = vmatprep.subr.mxu0 0.0
    %1847 = vmatpush1.msra.mxu0 0.0
    %1848 = vmatprep.subr.mxu0 0.0
    %1849 = vmatpush1.msra.mxu0 0.0
    %1850 = vmatprep.subr.mxu0 0.0
    %1851 = vmatpush1.msra.mxu0 0.0
    %1852 = vmatprep.subr.mxu0 0.0
    %1853 = vmatpush1.msra.mxu0 0.0
    %1854 = vmatprep.subr.mxu0 0.0
    %1855 = vmatpush1.msra.mxu0 0.0
    %1856 = vmatprep.subr.mxu0 0.0
    %1857 = vmatpush1.msra.mxu0 0.0
    %1858 = vmatprep.subr.mxu0 0.0
    %1859 = vmatpush1.msra.mxu0 0.0
    %1860 = vmatprep.subr.mxu0 0.0
    %1861 = vmatpush1.msra.mxu0 0.0
    %1862 = vmatprep.subr.mxu0 0.0
    %1863 = vmatpush1.msra.mxu0 0.0
    %1864 = vmatprep.subr.mxu0 0.0
    %1865 = vmatpush1.msra.mxu0 0.0
    %1866 = vmatprep.subr.mxu0 0.0
    %1867 = vmatpush1.msra.mxu0 0.0
    %1868 = vmatprep.subr.mxu0 0.0
    %1869 = vmatpush1.msra.mxu0 0.0
    %1870 = vmatprep.subr.mxu0 0.0
    %1871 = vmatpush1.msra.mxu0 0.0
    %1872 = vmatprep.subr.mxu0 0.0
    %1873 = vmatpush1.msra.mxu0 0.0
    %1874 = vmatprep.mubr.f32.mxu0 0.0
    %1875 = vmatmul.mubr.f32.gmra.mrb[0].mxu0 %v164
    %v1876 = vpop.f32.mrb[0].mxu0
    %v1877 = vpop.f32.mrb[0].mxu0
    %1878 = vmatprep.mubr.f32.mxu0 0.0
    %1879 = vmatmul.mubr.f32.gmra.mrb[0].mxu0 %v167
    %v1880 = vpop.f32.mrb[0].mxu0
    %v1881 = vpop.f32.mrb[0].mxu0
    %1882 = vmatprep.mubr.f32.mxu0 0.0
    %1883 = vmatmul.mubr.f32.gmra.mrb[0].mxu0 %v170
    %v1884 = vpop.f32.mrb[0].mxu0
    %v1885 = vadd.f32 0.0, %v1884
    %v1886 = vpop.f32.mrb[0].mxu0
    %v1887 = vadd.f32 0.0, %v1886
    %1888 = vdwg.mxu0
    %1889 = vmatprep.subr.mxu0 %v1643
    %1890 = vmatpush1.msra.mxu0 %v1642
    %1891 = vmatprep.subr.mxu0 0.0
    %1892 = vmatpush1.msra.mxu0 0.0
    %1893 = vmatprep.subr.mxu0 0.0
    %1894 = vmatpush1.msra.mxu0 0.0
    %1895 = vmatprep.subr.mxu0 0.0
    %1896 = vmatpush1.msra.mxu0 0.0
    %1897 = vmatprep.subr.mxu0 0.0
    %1898 = vmatpush1.msra.mxu0 0.0
    %1899 = vmatprep.subr.mxu0 0.0
    %1900 = vmatpush1.msra.mxu0 0.0
    %1901 = vmatprep.subr.mxu0 0.0
    %1902 = vmatpush1.msra.mxu0 0.0
    %1903 = vmatprep.subr.mxu0 0.0
    %1904 = vmatpush1.msra.mxu0 0.0
    %1905 = vmatprep.subr.mxu0 0.0
    %1906 = vmatpush1.msra.mxu0 0.0
    %1907 = vmatprep.subr.mxu0 0.0
    %1908 = vmatpush1.msra.mxu0 0.0
    %1909 = vmatprep.subr.mxu0 0.0
    %1910 = vmatpush1.msra.mxu0 0.0
    %1911 = vmatprep.subr.mxu0 0.0
    %1912 = vmatpush1.msra.mxu0 0.0
    %1913 = vmatprep.subr.mxu0 0.0
    %1914 = vmatpush1.msra.mxu0 0.0
    %1915 = vmatprep.subr.mxu0 0.0
    %1916 = vmatpush1.msra.mxu0 0.0
    %1917 = vmatprep.subr.mxu0 0.0
    %1918 = vmatpush1.msra.mxu0 0.0
    %1919 = vmatprep.subr.mxu0 0.0
    %1920 = vmatpush1.msra.mxu0 0.0
    %1921 = vmatprep.subr.mxu0 0.0
    %1922 = vmatpush1.msra.mxu0 0.0
    %1923 = vmatprep.subr.mxu0 0.0
    %1924 = vmatpush1.msra.mxu0 0.0
    %1925 = vmatprep.subr.mxu0 0.0
    %1926 = vmatpush1.msra.mxu0 0.0
    %1927 = vmatprep.subr.mxu0 0.0
    %1928 = vmatpush1.msra.mxu0 0.0
    %1929 = vmatprep.subr.mxu0 0.0
    %1930 = vmatpush1.msra.mxu0 0.0
    %1931 = vmatprep.subr.mxu0 0.0
    %1932 = vmatpush1.msra.mxu0 0.0
    %1933 = vmatprep.subr.mxu0 0.0
    %1934 = vmatpush1.msra.mxu0 0.0
    %1935 = vmatprep.subr.mxu0 0.0
    %1936 = vmatpush1.msra.mxu0 0.0
    %1937 = vmatprep.subr.mxu0 0.0
    %1938 = vmatpush1.msra.mxu0 0.0
    %1939 = vmatprep.subr.mxu0 0.0
    %1940 = vmatpush1.msra.mxu0 0.0
    %1941 = vmatprep.subr.mxu0 0.0
    %1942 = vmatpush1.msra.mxu0 0.0
    %1943 = vmatprep.subr.mxu0 0.0
    %1944 = vmatpush1.msra.mxu0 0.0
    %1945 = vmatprep.subr.mxu0 0.0
    %1946 = vmatpush1.msra.mxu0 0.0
    %1947 = vmatprep.subr.mxu0 0.0
    %1948 = vmatpush1.msra.mxu0 0.0
    %1949 = vmatprep.subr.mxu0 0.0
    %1950 = vmatpush1.msra.mxu0 0.0
    %1951 = vmatprep.subr.mxu0 0.0
    %1952 = vmatpush1.msra.mxu0 0.0
    %1953 = vmatprep.mubr.f32.mxu0 0.0
    %1954 = vmatmul.mubr.f32.gmra.mrb[0].mxu0 %v164
    %v1955 = vpop.f32.mrb[0].mxu0
    %v1956 = vpop.f32.mrb[0].mxu0
    %1957 = vmatprep.mubr.f32.mxu0 0.0
    %1958 = vmatmul.mubr.f32.gmra.mrb[0].mxu0 %v167
    %v1959 = vpop.f32.mrb[0].mxu0
    %v1960 = vpop.f32.mrb[0].mxu0
    %1961 = vmatprep.mubr.f32.mxu0 0.0
    %1962 = vmatmul.mubr.f32.gmra.mrb[0].mxu0 %v170
    %v1963 = vpop.f32.mrb[0].mxu0
    %v1964 = vadd.f32 0.0, %v1963
    %v1965 = vpop.f32.mrb[0].mxu0
    %v1966 = vadd.f32 0.0, %v1965
    %1967 = vdwg.mxu0
    %1968 = vmatprep.subr.mxu0 %v1645
    %1969 = vmatpush1.msra.mxu0 %v1644
    %1970 = vmatprep.subr.mxu0 0.0
    %1971 = vmatpush1.msra.mxu0 0.0
    %1972 = vmatprep.subr.mxu0 0.0
    %1973 = vmatpush1.msra.mxu0 0.0
    %1974 = vmatprep.subr.mxu0 0.0
    %1975 = vmatpush1.msra.mxu0 0.0
    %1976 = vmatprep.subr.mxu0 0.0
    %1977 = vmatpush1.msra.mxu0 0.0
    %1978 = vmatprep.subr.mxu0 0.0
    %1979 = vmatpush1.msra.mxu0 0.0
    %1980 = vmatprep.subr.mxu0 0.0
    %1981 = vmatpush1.msra.mxu0 0.0
    %1982 = vmatprep.subr.mxu0 0.0
    %1983 = vmatpush1.msra.mxu0 0.0
    %1984 = vmatprep.subr.mxu0 0.0
    %1985 = vmatpush1.msra.mxu0 0.0
    %1986 = vmatprep.subr.mxu0 0.0
    %1987 = vmatpush1.msra.mxu0 0.0
    %1988 = vmatprep.subr.mxu0 0.0
    %1989 = vmatpush1.msra.mxu0 0.0
    %1990 = vmatprep.subr.mxu0 0.0
    %1991 = vmatpush1.msra.mxu0 0.0
    %1992 = vmatprep.subr.mxu0 0.0
    %1993 = vmatpush1.msra.mxu0 0.0
    %1994 = vmatprep.subr.mxu0 0.0
    %1995 = vmatpush1.msra.mxu0 0.0
    %1996 = vmatprep.subr.mxu0 0.0
    %1997 = vmatpush1.msra.mxu0 0.0
    %1998 = vmatprep.subr.mxu0 0.0
    %1999 = vmatpush1.msra.mxu0 0.0
    %2000 = vmatprep.subr.mxu0 0.0
    %2001 = vmatpush1.msra.mxu0 0.0
    %2002 = vmatprep.subr.mxu0 0.0
    %2003 = vmatpush1.msra.mxu0 0.0
    %2004 = vmatprep.subr.mxu0 0.0
    %2005 = vmatpush1.msra.mxu0 0.0
    %2006 = vmatprep.subr.mxu0 0.0
    %2007 = vmatpush1.msra.mxu0 0.0
    %2008 = vmatprep.subr.mxu0 0.0
    %2009 = vmatpush1.msra.mxu0 0.0
    %2010 = vmatprep.subr.mxu0 0.0
    %2011 = vmatpush1.msra.mxu0 0.0
    %2012 = vmatprep.subr.mxu0 0.0
    %2013 = vmatpush1.msra.mxu0 0.0
    %2014 = vmatprep.subr.mxu0 0.0
    %2015 = vmatpush1.msra.mxu0 0.0
    %2016 = vmatprep.subr.mxu0 0.0
    %2017 = vmatpush1.msra.mxu0 0.0
    %2018 = vmatprep.subr.mxu0 0.0
    %2019 = vmatpush1.msra.mxu0 0.0
    %2020 = vmatprep.subr.mxu0 0.0
    %2021 = vmatpush1.msra.mxu0 0.0
    %2022 = vmatprep.subr.mxu0 0.0
    %2023 = vmatpush1.msra.mxu0 0.0
    %2024 = vmatprep.subr.mxu0 0.0
    %2025 = vmatpush1.msra.mxu0 0.0
    %2026 = vmatprep.subr.mxu0 0.0
    %2027 = vmatpush1.msra.mxu0 0.0
    %2028 = vmatprep.subr.mxu0 0.0
    %2029 = vmatpush1.msra.mxu0 0.0
    %2030 = vmatprep.subr.mxu0 0.0
    %2031 = vmatpush1.msra.mxu0 0.0
    %2032 = vmatprep.mubr.f32.mxu0 0.0
    %2033 = vmatmul.mubr.f32.gmra.mrb[0].mxu0 %v164
    %v2034 = vpop.f32.mrb[0].mxu0
    %v2035 = vpop.f32.mrb[0].mxu0
    %2036 = vmatprep.mubr.f32.mxu0 0.0
    %2037 = vmatmul.mubr.f32.gmra.mrb[0].mxu0 %v167
    %v2038 = vpop.f32.mrb[0].mxu0
    %v2039 = vpop.f32.mrb[0].mxu0
    %2040 = vmatprep.mubr.f32.mxu0 0.0
    %2041 = vmatmul.mubr.f32.gmra.mrb[0].mxu0 %v170
    %v2042 = vpop.f32.mrb[0].mxu0
    %v2043 = vadd.f32 0.0, %v2042
    %v2044 = vpop.f32.mrb[0].mxu0
    %v2045 = vadd.f32 0.0, %v2044
    %2046 = vdwg.mxu0
    %2047 = vmatprep.subr.mxu0 %v1647
    %2048 = vmatpush1.msra.mxu0 %v1646
    %2049 = vmatprep.subr.mxu0 0.0
    %2050 = vmatpush1.msra.mxu0 0.0
    %2051 = vmatprep.subr.mxu0 0.0
    %2052 = vmatpush1.msra.mxu0 0.0
    %2053 = vmatprep.subr.mxu0 0.0
    %2054 = vmatpush1.msra.mxu0 0.0
    %2055 = vmatprep.subr.mxu0 0.0
    %2056 = vmatpush1.msra.mxu0 0.0
    %2057 = vmatprep.subr.mxu0 0.0
    %2058 = vmatpush1.msra.mxu0 0.0
    %2059 = vmatprep.subr.mxu0 0.0
    %2060 = vmatpush1.msra.mxu0 0.0
    %2061 = vmatprep.subr.mxu0 0.0
    %2062 = vmatpush1.msra.mxu0 0.0
    %2063 = vmatprep.subr.mxu0 0.0
    %2064 = vmatpush1.msra.mxu0 0.0
    %2065 = vmatprep.subr.mxu0 0.0
    %2066 = vmatpush1.msra.mxu0 0.0
    %2067 = vmatprep.subr.mxu0 0.0
    %2068 = vmatpush1.msra.mxu0 0.0
    %2069 = vmatprep.subr.mxu0 0.0
    %2070 = vmatpush1.msra.mxu0 0.0
    %2071 = vmatprep.subr.mxu0 0.0
    %2072 = vmatpush1.msra.mxu0 0.0
    %2073 = vmatprep.subr.mxu0 0.0
    %2074 = vmatpush1.msra.mxu0 0.0
    %2075 = vmatprep.subr.mxu0 0.0
    %2076 = vmatpush1.msra.mxu0 0.0
    %2077 = vmatprep.subr.mxu0 0.0
    %2078 = vmatpush1.msra.mxu0 0.0
    %2079 = vmatprep.subr.mxu0 0.0
    %2080 = vmatpush1.msra.mxu0 0.0
    %2081 = vmatprep.subr.mxu0 0.0
    %2082 = vmatpush1.msra.mxu0 0.0
    %2083 = vmatprep.subr.mxu0 0.0
    %2084 = vmatpush1.msra.mxu0 0.0
    %2085 = vmatprep.subr.mxu0 0.0
    %2086 = vmatpush1.msra.mxu0 0.0
    %2087 = vmatprep.subr.mxu0 0.0
    %2088 = vmatpush1.msra.mxu0 0.0
    %2089 = vmatprep.subr.mxu0 0.0
    %2090 = vmatpush1.msra.mxu0 0.0
    %2091 = vmatprep.subr.mxu0 0.0
    %2092 = vmatpush1.msra.mxu0 0.0
    %2093 = vmatprep.subr.mxu0 0.0
    %2094 = vmatpush1.msra.mxu0 0.0
    %2095 = vmatprep.subr.mxu0 0.0
    %2096 = vmatpush1.msra.mxu0 0.0
    %2097 = vmatprep.subr.mxu0 0.0
    %2098 = vmatpush1.msra.mxu0 0.0
    %2099 = vmatprep.subr.mxu0 0.0
    %2100 = vmatpush1.msra.mxu0 0.0
    %2101 = vmatprep.subr.mxu0 0.0
    %2102 = vmatpush1.msra.mxu0 0.0
    %2103 = vmatprep.subr.mxu0 0.0
    %2104 = vmatpush1.msra.mxu0 0.0
    %2105 = vmatprep.subr.mxu0 0.0
    %2106 = vmatpush1.msra.mxu0 0.0
    %2107 = vmatprep.subr.mxu0 0.0
    %2108 = vmatpush1.msra.mxu0 0.0
    %2109 = vmatprep.subr.mxu0 0.0
    %2110 = vmatpush1.msra.mxu0 0.0
    %2111 = vmatprep.mubr.f32.mxu0 0.0
    %2112 = vmatmul.mubr.f32.gmra.mrb[0].mxu0 %v164
    %v2113 = vpop.f32.mrb[0].mxu0
    %v2114 = vpop.f32.mrb[0].mxu0
    %2115 = vmatprep.mubr.f32.mxu0 0.0
    %2116 = vmatmul.mubr.f32.gmra.mrb[0].mxu0 %v167
    %v2117 = vpop.f32.mrb[0].mxu0
    %v2118 = vpop.f32.mrb[0].mxu0
    %2119 = vmatprep.mubr.f32.mxu0 0.0
    %2120 = vmatmul.mubr.f32.gmra.mrb[0].mxu0 %v170
    %v2121 = vpop.f32.mrb[0].mxu0
    %v2122 = vadd.f32 0.0, %v2121
    %v2123 = vpop.f32.mrb[0].mxu0
    %v2124 = vadd.f32 0.0, %v2123
    %2125 = vdwg.mxu0
    %2126 = vmatprep.subr.mxu0 %v1649
    %2127 = vmatpush1.msra.mxu0 %v1648
    %2128 = vmatprep.subr.mxu0 0.0
    %2129 = vmatpush1.msra.mxu0 0.0
    %2130 = vmatprep.subr.mxu0 0.0
    %2131 = vmatpush1.msra.mxu0 0.0
    %2132 = vmatprep.subr.mxu0 0.0
    %2133 = vmatpush1.msra.mxu0 0.0
    %2134 = vmatprep.subr.mxu0 0.0
    %2135 = vmatpush1.msra.mxu0 0.0
    %2136 = vmatprep.subr.mxu0 0.0
    %2137 = vmatpush1.msra.mxu0 0.0
    %2138 = vmatprep.subr.mxu0 0.0
    %2139 = vmatpush1.msra.mxu0 0.0
    %2140 = vmatprep.subr.mxu0 0.0
    %2141 = vmatpush1.msra.mxu0 0.0
    %2142 = vmatprep.subr.mxu0 0.0
    %2143 = vmatpush1.msra.mxu0 0.0
    %2144 = vmatprep.subr.mxu0 0.0
    %2145 = vmatpush1.msra.mxu0 0.0
    %2146 = vmatprep.subr.mxu0 0.0
    %2147 = vmatpush1.msra.mxu0 0.0
    %2148 = vmatprep.subr.mxu0 0.0
    %2149 = vmatpush1.msra.mxu0 0.0
    %2150 = vmatprep.subr.mxu0 0.0
    %2151 = vmatpush1.msra.mxu0 0.0
    %2152 = vmatprep.subr.mxu0 0.0
    %2153 = vmatpush1.msra.mxu0 0.0
    %2154 = vmatprep.subr.mxu0 0.0
    %2155 = vmatpush1.msra.mxu0 0.0
    %2156 = vmatprep.subr.mxu0 0.0
    %2157 = vmatpush1.msra.mxu0 0.0
    %2158 = vmatprep.subr.mxu0 0.0
    %2159 = vmatpush1.msra.mxu0 0.0
    %2160 = vmatprep.subr.mxu0 0.0
    %2161 = vmatpush1.msra.mxu0 0.0
    %2162 = vmatprep.subr.mxu0 0.0
    %2163 = vmatpush1.msra.mxu0 0.0
    %2164 = vmatprep.subr.mxu0 0.0
    %2165 = vmatpush1.msra.mxu0 0.0
    %2166 = vmatprep.subr.mxu0 0.0
    %2167 = vmatpush1.msra.mxu0 0.0
    %2168 = vmatprep.subr.mxu0 0.0
    %2169 = vmatpush1.msra.mxu0 0.0
    %2170 = vmatprep.subr.mxu0 0.0
    %2171 = vmatpush1.msra.mxu0 0.0
    %2172 = vmatprep.subr.mxu0 0.0
    %2173 = vmatpush1.msra.mxu0 0.0
    %2174 = vmatprep.subr.mxu0 0.0
    %2175 = vmatpush1.msra.mxu0 0.0
    %2176 = vmatprep.subr.mxu0 0.0
    %2177 = vmatpush1.msra.mxu0 0.0
    %2178 = vmatprep.subr.mxu0 0.0
    %2179 = vmatpush1.msra.mxu0 0.0
    %2180 = vmatprep.subr.mxu0 0.0
    %2181 = vmatpush1.msra.mxu0 0.0
    %2182 = vmatprep.subr.mxu0 0.0
    %2183 = vmatpush1.msra.mxu0 0.0
    %2184 = vmatprep.subr.mxu0 0.0
    %2185 = vmatpush1.msra.mxu0 0.0
    %2186 = vmatprep.subr.mxu0 0.0
    %2187 = vmatpush1.msra.mxu0 0.0
    %2188 = vmatprep.subr.mxu0 0.0
    %2189 = vmatpush1.msra.mxu0 0.0
    %2190 = vmatprep.mubr.f32.mxu0 0.0
    %2191 = vmatmul.mubr.f32.gmra.mrb[0].mxu0 %v164
    %v2192 = vpop.f32.mrb[0].mxu0
    %v2193 = vpop.f32.mrb[0].mxu0
    %2194 = vmatprep.mubr.f32.mxu0 0.0
    %2195 = vmatmul.mubr.f32.gmra.mrb[0].mxu0 %v167
    %v2196 = vpop.f32.mrb[0].mxu0
    %v2197 = vpop.f32.mrb[0].mxu0
    %2198 = vmatprep.mubr.f32.mxu0 0.0
    %2199 = vmatmul.mubr.f32.gmra.mrb[0].mxu0 %v170
    %v2200 = vpop.f32.mrb[0].mxu0
    %v2201 = vadd.f32 0.0, %v2200
    %v2202 = vpop.f32.mrb[0].mxu0
    %v2203 = vadd.f32 0.0, %v2202
    %2204 = vdwg.mxu0
    %2205 = vmatprep.subr.mxu0 %v1651
    %2206 = vmatpush1.msra.mxu0 %v1650
    %2207 = vmatprep.subr.mxu0 0.0
    %2208 = vmatpush1.msra.mxu0 0.0
    %2209 = vmatprep.subr.mxu0 0.0
    %2210 = vmatpush1.msra.mxu0 0.0
    %2211 = vmatprep.subr.mxu0 0.0
    %2212 = vmatpush1.msra.mxu0 0.0
    %2213 = vmatprep.subr.mxu0 0.0
    %2214 = vmatpush1.msra.mxu0 0.0
    %2215 = vmatprep.subr.mxu0 0.0
    %2216 = vmatpush1.msra.mxu0 0.0
    %2217 = vmatprep.subr.mxu0 0.0
    %2218 = vmatpush1.msra.mxu0 0.0
    %2219 = vmatprep.subr.mxu0 0.0
    %2220 = vmatpush1.msra.mxu0 0.0
    %2221 = vmatprep.subr.mxu0 0.0
    %2222 = vmatpush1.msra.mxu0 0.0
    %2223 = vmatprep.subr.mxu0 0.0
    %2224 = vmatpush1.msra.mxu0 0.0
    %2225 = vmatprep.subr.mxu0 0.0
    %2226 = vmatpush1.msra.mxu0 0.0
    %2227 = vmatprep.subr.mxu0 0.0
    %2228 = vmatpush1.msra.mxu0 0.0
    %2229 = vmatprep.subr.mxu0 0.0
    %2230 = vmatpush1.msra.mxu0 0.0
    %2231 = vmatprep.subr.mxu0 0.0
    %2232 = vmatpush1.msra.mxu0 0.0
    %2233 = vmatprep.subr.mxu0 0.0
    %2234 = vmatpush1.msra.mxu0 0.0
    %2235 = vmatprep.subr.mxu0 0.0
    %2236 = vmatpush1.msra.mxu0 0.0
    %2237 = vmatprep.subr.mxu0 0.0
    %2238 = vmatpush1.msra.mxu0 0.0
    %2239 = vmatprep.subr.mxu0 0.0
    %2240 = vmatpush1.msra.mxu0 0.0
    %2241 = vmatprep.subr.mxu0 0.0
    %2242 = vmatpush1.msra.mxu0 0.0
    %2243 = vmatprep.subr.mxu0 0.0
    %2244 = vmatpush1.msra.mxu0 0.0
    %2245 = vmatprep.subr.mxu0 0.0
    %2246 = vmatpush1.msra.mxu0 0.0
    %2247 = vmatprep.subr.mxu0 0.0
    %2248 = vmatpush1.msra.mxu0 0.0
    %2249 = vmatprep.subr.mxu0 0.0
    %2250 = vmatpush1.msra.mxu0 0.0
    %2251 = vmatprep.subr.mxu0 0.0
    %2252 = vmatpush1.msra.mxu0 0.0
    %2253 = vmatprep.subr.mxu0 0.0
    %2254 = vmatpush1.msra.mxu0 0.0
    %2255 = vmatprep.subr.mxu0 0.0
    %2256 = vmatpush1.msra.mxu0 0.0
    %2257 = vmatprep.subr.mxu0 0.0
    %2258 = vmatpush1.msra.mxu0 0.0
    %2259 = vmatprep.subr.mxu0 0.0
    %2260 = vmatpush1.msra.mxu0 0.0
    %2261 = vmatprep.subr.mxu0 0.0
    %2262 = vmatpush1.msra.mxu0 0.0
    %2263 = vmatprep.subr.mxu0 0.0
    %2264 = vmatpush1.msra.mxu0 0.0
    %2265 = vmatprep.subr.mxu0 0.0
    %2266 = vmatpush1.msra.mxu0 0.0
    %2267 = vmatprep.subr.mxu0 0.0
    %2268 = vmatpush1.msra.mxu0 0.0
    %2269 = vmatprep.mubr.f32.mxu0 0.0
    %2270 = vmatmul.mubr.f32.gmra.mrb[0].mxu0 %v164
    %v2271 = vpop.f32.mrb[0].mxu0
    %v2272 = vpop.f32.mrb[0].mxu0
    %2273 = vmatprep.mubr.f32.mxu0 0.0
    %2274 = vmatmul.mubr.f32.gmra.mrb[0].mxu0 %v167
    %v2275 = vpop.f32.mrb[0].mxu0
    %v2276 = vpop.f32.mrb[0].mxu0
    %2277 = vmatprep.mubr.f32.mxu0 0.0
    %2278 = vmatmul.mubr.f32.gmra.mrb[0].mxu0 %v170
    %v2279 = vpop.f32.mrb[0].mxu0
    %v2280 = vadd.f32 0.0, %v2279
    %v2281 = vpop.f32.mrb[0].mxu0
    %v2282 = vadd.f32 0.0, %v2281
    %2283 = vdwg.mxu0
    %2285 = vset.pattern.permute.xlu0 8
    %2286 = vperm.xlu0 %2285, %v56
    %v2287 = vpop.permute.xlu0 %2286
    %v2289 = vadd.f32 %v1727, %v2287
    %v2290 = vadd.f32 %v1729, %v2287
    %v2291 = vadd.f32 %v1806, %v2287
    %v2292 = vadd.f32 %v1808, %v2287
    %v2293 = vadd.f32 %v1885, %v2287
    %v2294 = vadd.f32 %v1887, %v2287
    %v2295 = vadd.f32 %v1964, %v2287
    %v2296 = vadd.f32 %v1966, %v2287
    %v2297 = vadd.f32 %v2043, %v2287
    %v2298 = vadd.f32 %v2045, %v2287
    %v2299 = vadd.f32 %v2122, %v2287
    %v2300 = vadd.f32 %v2124, %v2287
    %v2301 = vadd.f32 %v2201, %v2287
    %v2302 = vadd.f32 %v2203, %v2287
    %v2303 = vadd.f32 %v2280, %v2287
    %v2304 = vadd.f32 %v2282, %v2287
    %v2305 = vxor.u32 %v2289, 2147483648
    %v2306 = vxor.u32 %v2290, 2147483648
    %v2307 = vxor.u32 %v2291, 2147483648
    %v2308 = vxor.u32 %v2292, 2147483648
    %v2309 = vxor.u32 %v2293, 2147483648
    %v2310 = vxor.u32 %v2294, 2147483648
    %v2311 = vxor.u32 %v2295, 2147483648
    %v2312 = vxor.u32 %v2296, 2147483648
    %v2313 = vxor.u32 %v2297, 2147483648
    %v2314 = vxor.u32 %v2298, 2147483648
    %v2315 = vxor.u32 %v2299, 2147483648
    %v2316 = vxor.u32 %v2300, 2147483648
    %v2317 = vxor.u32 %v2301, 2147483648
    %v2318 = vxor.u32 %v2302, 2147483648
    %v2319 = vxor.u32 %v2303, 2147483648
    %v2320 = vxor.u32 %v2304, 2147483648
    %v2321 = vmul.f32 %v2305, 1.442695
    %v2322 = vpow.pop %v2321
    %v2323 = vmul.f32 %v2306, 1.442695
    %v2324 = vpow.pop %v2323
    %v2325 = vmul.f32 %v2307, 1.442695
    %v2326 = vpow.pop %v2325
    %v2327 = vmul.f32 %v2308, 1.442695
    %v2328 = vpow.pop %v2327
    %v2329 = vmul.f32 %v2309, 1.442695
    %v2330 = vpow.pop %v2329
    %v2331 = vmul.f32 %v2310, 1.442695
    %v2332 = vpow.pop %v2331
    %v2333 = vmul.f32 %v2311, 1.442695
    %v2334 = vpow.pop %v2333
    %v2335 = vmul.f32 %v2312, 1.442695
    %v2336 = vpow.pop %v2335
    %v2337 = vmul.f32 %v2313, 1.442695
    %v2338 = vpow.pop %v2337
    %v2339 = vmul.f32 %v2314, 1.442695
    %v2340 = vpow.pop %v2339
    %v2341 = vmul.f32 %v2315, 1.442695
    %v2342 = vpow.pop %v2341
    %v2343 = vmul.f32 %v2316, 1.442695
    %v2344 = vpow.pop %v2343
    %v2345 = vmul.f32 %v2317, 1.442695
    %v2346 = vpow.pop %v2345
    %v2347 = vmul.f32 %v2318, 1.442695
    %v2348 = vpow.pop %v2347
    %v2349 = vmul.f32 %v2319, 1.442695
    %v2350 = vpow.pop %v2349
    %v2351 = vmul.f32 %v2320, 1.442695
    %v2352 = vpow.pop %v2351
    %v2353 = vadd.f32 %v2322, 1.0
    %v2354 = vadd.f32 %v2324, 1.0
    %v2355 = vadd.f32 %v2326, 1.0
    %v2356 = vadd.f32 %v2328, 1.0
    %v2357 = vadd.f32 %v2330, 1.0
    %v2358 = vadd.f32 %v2332, 1.0
    %v2359 = vadd.f32 %v2334, 1.0
    %v2360 = vadd.f32 %v2336, 1.0
    %v2361 = vadd.f32 %v2338, 1.0
    %v2362 = vadd.f32 %v2340, 1.0
    %v2363 = vadd.f32 %v2342, 1.0
    %v2364 = vadd.f32 %v2344, 1.0
    %v2365 = vadd.f32 %v2346, 1.0
    %v2366 = vadd.f32 %v2348, 1.0
    %v2367 = vadd.f32 %v2350, 1.0
    %v2368 = vadd.f32 %v2352, 1.0
    %v2369 = vrcp.pop %v2353
    %v2370 = vmul.f32 1.0, %v2369
    %v2371 = vrcp.pop %v2354
    %v2372 = vmul.f32 1.0, %v2371
    %v2373 = vrcp.pop %v2355
    %v2374 = vmul.f32 1.0, %v2373
    %v2375 = vrcp.pop %v2356
    %v2376 = vmul.f32 1.0, %v2375
    %v2377 = vrcp.pop %v2357
    %v2378 = vmul.f32 1.0, %v2377
    %v2379 = vrcp.pop %v2358
    %v2380 = vmul.f32 1.0, %v2379
    %v2381 = vrcp.pop %v2359
    %v2382 = vmul.f32 1.0, %v2381
    %v2383 = vrcp.pop %v2360
    %v2384 = vmul.f32 1.0, %v2383
    %v2385 = vrcp.pop %v2361
    %v2386 = vmul.f32 1.0, %v2385
    %v2387 = vrcp.pop %v2362
    %v2388 = vmul.f32 1.0, %v2387
    %v2389 = vrcp.pop %v2363
    %v2390 = vmul.f32 1.0, %v2389
    %v2391 = vrcp.pop %v2364
    %v2392 = vmul.f32 1.0, %v2391
    %v2393 = vrcp.pop %v2365
    %v2394 = vmul.f32 1.0, %v2393
    %v2395 = vrcp.pop %v2366
    %v2396 = vmul.f32 1.0, %v2395
    %v2397 = vrcp.pop %v2367
    %v2398 = vmul.f32 1.0, %v2397
    %v2399 = vrcp.pop %v2368
    %v2400 = vmul.f32 1.0, %v2399
    %v2401 = vmul.f32 %v2370, %v64
    %v2402 = vmul.f32 %v2372, %v68
    %v2403 = vmul.f32 %v2374, %v72
    %v2404 = vmul.f32 %v2376, %v76
    %v2405 = vmul.f32 %v2378, %v80
    %v2406 = vmul.f32 %v2380, %v84
    %v2407 = vmul.f32 %v2382, %v88
    %v2408 = vmul.f32 %v2384, %v92
    %v2409 = vmul.f32 %v2386, %v96
    %v2410 = vmul.f32 %v2388, %v100
    %v2411 = vmul.f32 %v2390, %v104
    %v2412 = vmul.f32 %v2392, %v108
    %v2413 = vmul.f32 %v2394, %v112
    %v2414 = vmul.f32 %v2396, %v116
    %v2415 = vmul.f32 %v2398, %v120
    %v2416 = vmul.f32 %v2400, %v124
    %v2433 = vcombine.low %v2401, %v2402
    %v2434 = vcombine.low %v2403, %v2404
    %v2435 = vcombine.low %v2405, %v2406
    %v2436 = vcombine.low %v2407, %v2408
    %v2438 = vunpack.c.l.s4 1966171168
    %v2439 = vunpack.c.0.s8 %v2438
    %v2440 = vlaneseq
    %v2441 = vshrl.u32 %v2440, 7
    %v2442 = vsub.s32 %v2439, %v2441
    %v2443 = vrot.slane %v2433, %v2442
    %v2445 = vunpack.c.l.s4 1966171168
    %v2446 = vunpack.c.0.s8 %v2445
    %v2447 = vlaneseq
    %v2448 = vshrl.u32 %v2447, 7
    %v2449 = vsub.s32 %v2446, %v2448
    %v2450 = vrot.slane %v2434, %v2449
    %v2452 = vunpack.c.l.s4 1966171168
    %v2453 = vunpack.c.0.s8 %v2452
    %v2454 = vlaneseq
    %v2455 = vshrl.u32 %v2454, 7
    %v2456 = vsub.s32 %v2453, %v2455
    %v2457 = vrot.slane %v2435, %v2456
    %v2459 = vunpack.c.l.s4 1966171168
    %v2460 = vunpack.c.0.s8 %v2459
    %v2461 = vlaneseq
    %v2462 = vshrl.u32 %v2461, 7
    %v2463 = vsub.s32 %v2460, %v2462
    %v2464 = vrot.slane %v2436, %v2463
    %v2465 = vcombine.low %v2443, %v2450
    %v2466 = vcombine.low %v2457, %v2464
    %v2468 = vunpack.c.l.s4 1966171168
    %v2469 = vunpack.c.0.s8 %v2468
    %v2470 = vlaneseq
    %v2471 = vshrl.u32 %v2470, 7
    %v2472 = vsub.s32 %v2469, %v2471
    %v2473 = vrot.slane %v2465, %v2472
    %v2475 = vunpack.c.l.s4 1966171168
    %v2476 = vunpack.c.0.s8 %v2475
    %v2477 = vlaneseq
    %v2478 = vshrl.u32 %v2477, 7
    %v2479 = vsub.s32 %v2476, %v2478
    %v2480 = vrot.slane %v2466, %v2479
    %v2481 = vcombine.low %v2473, %v2480
    %v2482 = vcombine.low %v2409, %v2410
    %v2483 = vcombine.low %v2411, %v2412
    %v2484 = vcombine.low %v2413, %v2414
    %v2485 = vcombine.low %v2415, %v2416
    %v2487 = vunpack.c.l.s4 1966171168
    %v2488 = vunpack.c.0.s8 %v2487
    %v2489 = vlaneseq
    %v2490 = vshrl.u32 %v2489, 7
    %v2491 = vsub.s32 %v2488, %v2490
    %v2492 = vrot.slane %v2482, %v2491
    %v2494 = vunpack.c.l.s4 1966171168
    %v2495 = vunpack.c.0.s8 %v2494
    %v2496 = vlaneseq
    %v2497 = vshrl.u32 %v2496, 7
    %v2498 = vsub.s32 %v2495, %v2497
    %v2499 = vrot.slane %v2483, %v2498
    %v2501 = vunpack.c.l.s4 1966171168
    %v2502 = vunpack.c.0.s8 %v2501
    %v2503 = vlaneseq
    %v2504 = vshrl.u32 %v2503, 7
    %v2505 = vsub.s32 %v2502, %v2504
    %v2506 = vrot.slane %v2484, %v2505
    %v2508 = vunpack.c.l.s4 1966171168
    %v2509 = vunpack.c.0.s8 %v2508
    %v2510 = vlaneseq
    %v2511 = vshrl.u32 %v2510, 7
    %v2512 = vsub.s32 %v2509, %v2511
    %v2513 = vrot.slane %v2485, %v2512
    %v2514 = vcombine.low %v2492, %v2499
    %v2515 = vcombine.low %v2506, %v2513
    %v2517 = vunpack.c.l.s4 1966171168
    %v2518 = vunpack.c.0.s8 %v2517
    %v2519 = vlaneseq
    %v2520 = vshrl.u32 %v2519, 7
    %v2521 = vsub.s32 %v2518, %v2520
    %v2522 = vrot.slane %v2514, %v2521
    %v2524 = vunpack.c.l.s4 1966171168
    %v2525 = vunpack.c.0.s8 %v2524
    %v2526 = vlaneseq
    %v2527 = vshrl.u32 %v2526, 7
    %v2528 = vsub.s32 %v2525, %v2527
    %v2529 = vrot.slane %v2515, %v2528
    %v2530 = vcombine.low %v2522, %v2529
    %2533 = vst [vmem:[#allocation8] sm:$0xff] %v2481
    %2534 = vst [vmem:[#allocation8 + $0x8] sm:$0xff] %v2530
    // Predicated region
    $region26: #{tpu_custom_call.1} parent=1 // pred_check
      _
    $region27: #{tpu_custom_call.1} parent=1 // pred_check_branch
      %2536 = sbr.rel (0) target = $region29
    $region28: #{tpu_custom_call.1} parent=1 // pred_region
      %s2538 = ssub.s32 256, 256
      %2539 = vsyncadd [#allocation4], %s2538
      %s2541 = sshll.u32 [#allocation8], 4
      %s2542 = int_to_ptr.vmem [resolvable:$true] %s2541
      %2544 = dma.vmem_to_hbm [thread:$0]  %s2542, 256, %s3, [#allocation4]
    $region29: #{tpu_custom_call.1} parent=1 // pred_fallthru
      _
    // Predicated region
    $region30: #{tpu_custom_call.1} parent=1 // pred_check
      _
    $region31: #{tpu_custom_call.1} parent=1 // pred_check_branch
      %2546 = sbr.rel (0) target = $region33
    $region32: #{tpu_custom_call.1} parent=1 // pred_region
      %2547 = dma.done [#allocation4], 256
    $region33: #{tpu_custom_call.1} parent=1 // pred_fallthru
      _
    %2548 = vsyncpa [#allocation3], 1
    %2549 = vsyncpa [#allocation6], 1
    %2550 = vsyncpa [#allocation4], 1

</llo_original>
